<compile_context>
chip_gen: v6e
topology: v6e:2x2x1
jax: 0.10.0
libtpu: 0.0.40
codegen_flags: <defaults>
</compile_context>

<pallas_src>
import math
import functools

import jax
import jax.numpy as jnp
from jax import lax
from jax.experimental import pallas as pl
from jax.experimental.pallas import tpu as pltpu

# ----------------------------- config (small) -----------------------------
BATCH = 2
SEQ = 8
EMBED = 32
NUM_HEADS = 4
HEAD_DIM = EMBED // NUM_HEADS
NUM_DECAYS = 2


# --------------------------- fused forward kernel ---------------------------
def _fused_mdta_kernel(x_ref, wqkv_ref, wo_ref, bo_ref, mask_ref, o_ref, *,
                       batch, seq, num_heads, head_dim):
    """Entire forward in one grid-less program; all operands VMEM-resident.

    x_ref    : (B*S, E+1)      input tokens with a trailing ones column
    wqkv_ref : (3H, E+1, D)    head-major fused q/k/v weights, biases folded
                               into the last (ones) row of each slab
    wo_ref   : (H, D, E)       output-proj weight split by head (rows of Wo^T)
    bo_ref   : (1, E)          output-proj bias
    mask_ref : (H*B, S, S)     decay mask (per head, repeated over batch) with
                               the 1/sqrt(D) scale folded in
    o_ref    : (B*S, E)        output
    """
    B, S, H, D = batch, seq, num_heads, head_dim
    BS, HB = B * S, H * B
    E1 = x_ref.shape[-1]                      # E + 1 (ones column = biases)

    # ---- fused, head-major QKV projection: one 3H-way batched matmul ----
    x_rep = jnp.broadcast_to(x_ref[...][None], (3 * H, BS, E1))
    qkv = lax.dot_general(
        x_rep, wqkv_ref[...],
        dimension_numbers=(((2,), (1,)), ((0,), (0,))),
        preferred_element_type=jnp.float32)                    # (3H, BS, D)

    # Leading-axis slices + leading-dim reshapes only (no lane shuffles).
    # Attention batch index is h*B + b.
    q = qkv[0 * H:1 * H].reshape(HB, S, D)
    k = qkv[1 * H:2 * H].reshape(HB, S, D)
    v = qkv[2 * H:3 * H].reshape(HB, S, D)

    # ---- batched decay-masked attention over the H*B axis ----
    s = lax.dot_general(q, k,
                        dimension_numbers=(((2,), (2,)), ((0,), (0,))),
                        preferred_element_type=jnp.float32)    # (HB, S, S)
    s = s * mask_ref[...]                    # decay mask, 1/sqrt(D) folded in

    # Numerically-stable softmax over keys (batched).
    s = s - jnp.max(s, axis=-1, keepdims=True)
    p = jnp.exp(s)
    p = p / jnp.sum(p, axis=-1, keepdims=True)

    o = lax.dot_general(p, v,
                        dimension_numbers=(((2,), (1,)), ((0,), (0,))),
                        preferred_element_type=jnp.float32)    # (HB, S, D)

    # ---- output projection accumulated per head (no head-concat scratch) ----
    partial = lax.dot_general(o.reshape(H, BS, D), wo_ref[...],
                              dimension_numbers=(((2,), (1,)), ((0,), (0,))),
                              preferred_element_type=jnp.float32)  # (H, BS, E)
    out = jnp.sum(partial, axis=0) + bo_ref[...]
    o_ref[...] = out.astype(o_ref.dtype)


# ------------------------------ decay mask (glue) ----------------------------
def build_decay_mask(decay_params, mix_weights, seq_len):
    # decay_params, mix_weights: (H, num_decays)
    t = jnp.arange(seq_len)
    time_diffs = jnp.abs(t[:, None] - t[None, :]).astype(jnp.float32)      # (S, S)
    dp = jnp.clip(decay_params, 0.01, 0.9999)                              # (H, ND)
    masks = dp[:, :, None, None] ** time_diffs[None, None, :, :]           # (H, ND, S, S)
    mix = jax.nn.softmax(mix_weights, axis=-1)                             # (H, ND)
    return (masks * mix[:, :, None, None]).sum(axis=1)                     # (H, S, S)


# ------------------------------ full forward --------------------------------
@jax.jit
def multi_decay_temporal_attention(x, params):
    B, S, E = x.shape
    H, D = NUM_HEADS, HEAD_DIM
    BS = B * S

    # Parameter / layout plumbing done once outside the kernel.
    def head_major_aug(w, b):
        # w: (E_out, E_in) torch-Linear layout; b: (E_out,)
        w_aug = jnp.concatenate([w.T, b[None, :]], axis=0)      # (E+1, E_out)
        return w_aug.reshape(E + 1, H, D).transpose(1, 0, 2)    # (H, E+1, D)

    wqkv = jnp.concatenate(
        [head_major_aug(params["q_w"], params["q_b"]),
         head_major_aug(params["k_w"], params["k_b"]),
         head_major_aug(params["v_w"], params["v_b"])], axis=0)  # (3H, E+1, D)
    wo_h = params["o_w"].T.reshape(H, D, E)                      # (H, D, E)
    bo = params["o_b"].reshape(1, E)                             # (1, E)

    mask = build_decay_mask(params["decay_params"], params["mix_weights"], S)
    mask = mask * (1.0 / math.sqrt(D))                           # fold scale
    mask_hb = jnp.repeat(mask, B, axis=0)                        # (H*B, S, S)

    x_aug = jnp.concatenate(
        [x.reshape(BS, E), jnp.ones((BS, 1), x.dtype)], axis=1)  # (BS, E+1)

    kernel = functools.partial(
        _fused_mdta_kernel, batch=B, seq=S, num_heads=H, head_dim=D)
    vmem = pl.BlockSpec(memory_space=pltpu.MemorySpace.VMEM)

    out2d = pl.pallas_call(
        kernel,
        out_shape=jax.ShapeDtypeStruct((BS, E), jnp.float32),
        in_specs=[vmem] * 5,
        out_specs=vmem,
    )(x_aug, wqkv, wo_h, bo, mask_hb)

    return out2d.reshape(B, S, E)


# ------------------------------ pure-JAX reference ---------------------------
def reference_forward(x, params):
    B, S, E = x.shape
    H, D = NUM_HEADS, HEAD_DIM

    def lin(t, w, b):
        return t @ w.T + b

    q = lin(x, params["q_w"], params["q_b"]).reshape(B, S, H, D).transpose(0, 2, 1, 3)
    k = lin(x, params["k_w"], params["k_b"]).reshape(B, S, H, D).transpose(0, 2, 1, 3)
    v = lin(x, params["v_w"], params["v_b"]).reshape(B, S, H, D).transpose(0, 2, 1, 3)

    scores = jnp.einsum("bhqd,bhkd->bhqk", q, k) / math.sqrt(D)
    decay_mask = build_decay_mask(params["decay_params"], params["mix_weights"], S)
    scores = scores * decay_mask[None]
    probs = jax.nn.softmax(scores, axis=-1)
    out = jnp.einsum("bhqk,bhkd->bhqd", probs, v)
    out = out.transpose(0, 2, 1, 3).reshape(B, S, E)
    return lin(out, params["o_w"], params["o_b"])


# --------------------------------- main -------------------------------------
def init_params(key):
    ks = jax.random.split(key, 9)
    bound = 1.0 / math.sqrt(EMBED)

    def u(k, shape):
        return jax.random.uniform(k, shape, jnp.float32, -bound, bound)

    params = {
        "q_w": u(ks[0], (EMBED, EMBED)), "q_b": u(ks[1], (EMBED,)),
        "k_w": u(ks[2], (EMBED, EMBED)), "k_b": u(ks[3], (EMBED,)),
        "v_w": u(ks[4], (EMBED, EMBED)), "v_b": u(ks[5], (EMBED,)),
        "o_w": u(ks[6], (EMBED, EMBED)), "o_b": u(ks[7], (EMBED,)),
        # module inits decay to 0.95 / mix to zeros; add small deterministic
        # perturbations so each head/decay branch exercises distinct values.
        "decay_params": jnp.full((NUM_HEADS, NUM_DECAYS), 0.95, jnp.float32)
        + jnp.arange(NUM_HEADS * NUM_DECAYS, dtype=jnp.float32).reshape(
            NUM_HEADS, NUM_DECAYS
        )
        * (-0.05),
        "mix_weights": 0.1
        * jax.random.normal(ks[8], (NUM_HEADS, NUM_DECAYS), jnp.float32),
    }
    return params


if __name__ == "__main__":
    key = jax.random.PRNGKey(0)
    pkey, xkey = jax.random.split(key)
    params = init_params(pkey)
    x = jax.random.normal(xkey, (BATCH, SEQ, EMBED), jnp.float32)

    out = jax.block_until_ready(multi_decay_temporal_attention(x, params))
    ref = jax.block_until_ready(reference_forward(x, params))

    assert out.shape == (BATCH, SEQ, EMBED)
    assert jnp.allclose(out, ref, atol=1e-4, rtol=1e-4), "mismatch vs reference"

    print("KERNEL_OK")
</pallas_src>

<mosaic_0001>
module attributes {stable_mosaic.version = 11 : i64} {
  func.func @_fused_mdta_kernel(%arg0: memref<16x33xf32, #tpu.memory_space<vmem>>, %arg1: memref<12x33x8xf32, #tpu.memory_space<vmem>>, %arg2: memref<4x8x32xf32, #tpu.memory_space<vmem>>, %arg3: memref<1x32xf32, #tpu.memory_space<vmem>>, %arg4: memref<8x8x8xf32, #tpu.memory_space<vmem>>, %arg5: memref<16x32xf32, #tpu.memory_space<vmem>>) attributes {dimension_semantics = [], scalar_prefetch = 0 : i64, scratch_operands = 0 : i64, tpu.core_type = #tpu.core_type<tc>} {
    %c0 = arith.constant 0 : index
    %c0_0 = arith.constant 0 : index
    %0 = vector.load %arg0[%c0, %c0_0] : memref<16x33xf32, #tpu.memory_space<vmem>>, vector<16x33xf32>
    %1 = vector.shape_cast %0 : vector<16x33xf32> to vector<1x16x33xf32>
    %2 = vector.shape_cast %1 : vector<1x16x33xf32> to vector<1x16x33xf32>
    %3 = vector.broadcast %2 : vector<1x16x33xf32> to vector<12x16x33xf32>
    %c0_1 = arith.constant 0 : index
    %c0_2 = arith.constant 0 : index
    %c0_3 = arith.constant 0 : index
    %4 = vector.load %arg1[%c0_1, %c0_2, %c0_3] : memref<12x33x8xf32, #tpu.memory_space<vmem>>, vector<12x33x8xf32>
    %cst = arith.constant dense<0.000000e+00> : vector<12x16x8xf32>
    %5 = tpu.matmul %3, %4, %cst {dimension_numbers = #tpu.dot_dimension_numbers<[2], [1], [1], [2], [0, 0, 0, 1, 1, 2], [0], [0]>} : vector<12x16x33xf32>, vector<12x33x8xf32>, vector<12x16x8xf32> -> vector<12x16x8xf32>
    %6 = vector.extract_strided_slice %5 {offsets = [0, 0, 0], sizes = [4, 16, 8], strides = [1, 1, 1]} : vector<12x16x8xf32> to vector<4x16x8xf32>
    %7 = vector.shape_cast %6 : vector<4x16x8xf32> to vector<8x8x8xf32>
    %8 = vector.extract_strided_slice %5 {offsets = [4, 0, 0], sizes = [4, 16, 8], strides = [1, 1, 1]} : vector<12x16x8xf32> to vector<4x16x8xf32>
    %9 = vector.shape_cast %8 : vector<4x16x8xf32> to vector<8x8x8xf32>
    %10 = vector.extract_strided_slice %5 {offsets = [8, 0, 0], sizes = [4, 16, 8], strides = [1, 1, 1]} : vector<12x16x8xf32> to vector<4x16x8xf32>
    %11 = vector.shape_cast %10 : vector<4x16x8xf32> to vector<8x8x8xf32>
    %cst_4 = arith.constant dense<0.000000e+00> : vector<8x8x8xf32>
    %12 = tpu.matmul %7, %9, %cst_4 {dimension_numbers = #tpu.dot_dimension_numbers<[2], [2], [1], [1], [0, 0, 0, 1, 1, 1], [0], [0]>} : vector<8x8x8xf32>, vector<8x8x8xf32>, vector<8x8x8xf32> -> vector<8x8x8xf32>
    %c0_5 = arith.constant 0 : index
    %c0_6 = arith.constant 0 : index
    %c0_7 = arith.constant 0 : index
    %13 = vector.load %arg4[%c0_5, %c0_6, %c0_7] : memref<8x8x8xf32, #tpu.memory_space<vmem>>, vector<8x8x8xf32>
    %14 = arith.mulf %12, %13 : vector<8x8x8xf32>
    %cst_8 = arith.constant dense<0xFF800000> : vector<8x8xf32>
    %15 = vector.multi_reduction <maximumf>, %14, %cst_8 [2] : vector<8x8x8xf32> to vector<8x8xf32>
    %16 = vector.shape_cast %15 : vector<8x8xf32> to vector<8x8x1xf32>
    %17 = vector.broadcast %16 : vector<8x8x1xf32> to vector<8x8x8xf32>
    %18 = arith.subf %14, %17 : vector<8x8x8xf32>
    %19 = math.exp %18 : vector<8x8x8xf32>
    %cst_9 = arith.constant dense<0.000000e+00> : vector<8x8xf32>
    %20 = vector.multi_reduction <add>, %19, %cst_9 [2] : vector<8x8x8xf32> to vector<8x8xf32>
    %21 = vector.shape_cast %20 : vector<8x8xf32> to vector<8x8x1xf32>
    %22 = vector.broadcast %21 : vector<8x8x1xf32> to vector<8x8x8xf32>
    %23 = arith.divf %19, %22 : vector<8x8x8xf32>
    %cst_10 = arith.constant dense<0.000000e+00> : vector<8x8x8xf32>
    %24 = tpu.matmul %23, %11, %cst_10 {dimension_numbers = #tpu.dot_dimension_numbers<[2], [1], [1], [2], [0, 0, 0, 1, 1, 2], [0], [0]>} : vector<8x8x8xf32>, vector<8x8x8xf32>, vector<8x8x8xf32> -> vector<8x8x8xf32>
    %25 = vector.shape_cast %24 : vector<8x8x8xf32> to vector<4x16x8xf32>
    %c0_11 = arith.constant 0 : index
    %c0_12 = arith.constant 0 : index
    %c0_13 = arith.constant 0 : index
    %26 = vector.load %arg2[%c0_11, %c0_12, %c0_13] : memref<4x8x32xf32, #tpu.memory_space<vmem>>, vector<4x8x32xf32>
    %cst_14 = arith.constant dense<0.000000e+00> : vector<4x16x32xf32>
    %27 = tpu.matmul %25, %26, %cst_14 {dimension_numbers = #tpu.dot_dimension_numbers<[2], [1], [1], [2], [0, 0, 0, 1, 1, 2], [0], [0]>} : vector<4x16x8xf32>, vector<4x8x32xf32>, vector<4x16x32xf32> -> vector<4x16x32xf32>
    %cst_15 = arith.constant dense<0.000000e+00> : vector<16x32xf32>
    %28 = vector.multi_reduction <add>, %27, %cst_15 [0] : vector<4x16x32xf32> to vector<16x32xf32>
    %c0_16 = arith.constant 0 : index
    %c0_17 = arith.constant 0 : index
    %29 = vector.load %arg3[%c0_16, %c0_17] : memref<1x32xf32, #tpu.memory_space<vmem>>, vector<1x32xf32>
    %30 = vector.broadcast %29 : vector<1x32xf32> to vector<16x32xf32>
    %31 = arith.addf %28, %30 : vector<16x32xf32>
    %c0_18 = arith.constant 0 : index
    %c0_19 = arith.constant 0 : index
    %32 = vector.load %arg5[%c0_18, %c0_19] : memref<16x32xf32, #tpu.memory_space<vmem>>, vector<16x32xf32>
    tpu.vector_store %arg5[%c0_18, %c0_19], %31 {strides = array<i32>} : memref<16x32xf32, #tpu.memory_space<vmem>>, vector<16x32xf32>,
    return
  }
}

</mosaic_0001>

<llo_original>
// kernel: multi_decay_temporal_attention.1
$region0: #{multi_decay_temporal_attention.1}
  #allocation0 [shape = 'u32[]', space=smem, size = 0x4, offset = 0x4, fixed_abs, tag = 'smem constant byte address 0x4 - core index']
  #allocation1 [shape = 'u32[144,128]{1,0:T(1,128)}', space=vmem, size = 0x12000, scoped, tag = 'internal scratch']
  %s0 = inlined_call_operand.vmem [shape: f32[16,33], index: 0, kind: input, shape index: {}]
  %s1 = inlined_call_operand.vmem [shape: f32[12,33,8], index: 1, kind: input, shape index: {}]
  %s2 = inlined_call_operand.vmem [shape: f32[4,8,32], index: 2, kind: input, shape index: {}]
  %s3 = inlined_call_operand.vmem [shape: f32[1,32], index: 3, kind: input, shape index: {}]
  %s4 = inlined_call_operand.vmem [shape: f32[8,8,8], index: 4, kind: input, shape index: {}]
  %s5 = inlined_call_operand.hbm [shape: f32[16,32], index: 5, kind: output, shape index: {}]
  %s6 = sld [smem:[#allocation0]]
  $region30: #{multi_decay_temporal_attention.1} parent=0
    _
  %s8 = ssub.s32 1, %s6
  %s9 = scalar_select 0, %s8, %s6
  $region1: #{multi_decay_temporal_attention.1} parent=0
    #allocation2 [shape = 'u8[8192]{0}', space=vmem, size = 0x2000, scoped, tag = 'output window, operand 0, single buffered']
    #allocation3 [shape = 's32[1]{0}', space=sflag, size = 0x4, scoped, tag = 'scoped memory for multi_decay_temporal_attention.1']
    %10 = vsyncpa [#allocation3], 0
    // Predicated region
    $region2: #{multi_decay_temporal_attention.1} parent=1 // pred_check
      _
    $region3: #{multi_decay_temporal_attention.1} parent=1 // pred_check_branch
      %12 = sbr.rel (0) target = $region5
    $region4: #{multi_decay_temporal_attention.1} parent=1 // pred_region
      _
    $region5: #{multi_decay_temporal_attention.1} parent=1 // pred_fallthru
      _
    // Predicated region
    $region6: #{multi_decay_temporal_attention.1} parent=1 // pred_check
      _
    $region7: #{multi_decay_temporal_attention.1} parent=1 // pred_check_branch
      %14 = sbr.rel (0) target = $region9
    $region8: #{multi_decay_temporal_attention.1} parent=1 // pred_region
      _
    $region9: #{multi_decay_temporal_attention.1} parent=1 // pred_fallthru
      _
    // Predicated region
    $region10: #{multi_decay_temporal_attention.1} parent=1 // pred_check
      _
    $region11: #{multi_decay_temporal_attention.1} parent=1 // pred_check_branch
      %16 = sbr.rel (0) target = $region13
    $region12: #{multi_decay_temporal_attention.1} parent=1 // pred_region
      _
    $region13: #{multi_decay_temporal_attention.1} parent=1 // pred_fallthru
      _
    // Predicated region
    $region14: #{multi_decay_temporal_attention.1} parent=1 // pred_check
      _
    $region15: #{multi_decay_temporal_attention.1} parent=1 // pred_check_branch
      %18 = sbr.rel (0) target = $region17
    $region16: #{multi_decay_temporal_attention.1} parent=1 // pred_region
      _
    $region17: #{multi_decay_temporal_attention.1} parent=1 // pred_fallthru
      _
    // Predicated region
    $region18: #{multi_decay_temporal_attention.1} parent=1 // pred_check
      _
    $region19: #{multi_decay_temporal_attention.1} parent=1 // pred_check_branch
      %20 = sbr.rel (0) target = $region21
    $region20: #{multi_decay_temporal_attention.1} parent=1 // pred_region
      _
    $region21: #{multi_decay_temporal_attention.1} parent=1 // pred_fallthru
      _
    %v21 = vld [vmem:[%s0] sm:$0xff]
    %v22 = vld [vmem:[%s0 + $0x8] sm:$0xff]
    %v23 = vld [vmem:[%s1] sm:$0xff]
    %v24 = vld [vmem:[%s1 + $0x8] sm:$0xff]
    %v25 = vld [vmem:[%s1 + $0x10] sm:$0xff]
    %v26 = vld [vmem:[%s1 + $0x18] sm:$0xff]
    %v27 = vld [vmem:[%s1 + $0x20] sm:$0x1]
    %v28 = vld [vmem:[%s1 + $0x28] sm:$0xff]
    %v29 = vld [vmem:[%s1 + $0x30] sm:$0xff]
    %v30 = vld [vmem:[%s1 + $0x38] sm:$0xff]
    %v31 = vld [vmem:[%s1 + $0x40] sm:$0xff]
    %v32 = vld [vmem:[%s1 + $0x48] sm:$0x1]
    %v33 = vld [vmem:[%s1 + $0x50] sm:$0xff]
    %v34 = vld [vmem:[%s1 + $0x58] sm:$0xff]
    %v35 = vld [vmem:[%s1 + $0x60] sm:$0xff]
    %v36 = vld [vmem:[%s1 + $0x68] sm:$0xff]
    %v37 = vld [vmem:[%s1 + $0x70] sm:$0x1]
    %v38 = vld [vmem:[%s1 + $0x78] sm:$0xff]
    %v39 = vld [vmem:[%s1 + $0x80] sm:$0xff]
    %v40 = vld [vmem:[%s1 + $0x88] sm:$0xff]
    %v41 = vld [vmem:[%s1 + $0x90] sm:$0xff]
    %v42 = vld [vmem:[%s1 + $0x98] sm:$0x1]
    %v43 = vld [vmem:[%s1 + $0xa0] sm:$0xff]
    %v44 = vld [vmem:[%s1 + $0xa8] sm:$0xff]
    %v45 = vld [vmem:[%s1 + $0xb0] sm:$0xff]
    %v46 = vld [vmem:[%s1 + $0xb8] sm:$0xff]
    %v47 = vld [vmem:[%s1 + $0xc0] sm:$0x1]
    %v48 = vld [vmem:[%s1 + $0xc8] sm:$0xff]
    %v49 = vld [vmem:[%s1 + $0xd0] sm:$0xff]
    %v50 = vld [vmem:[%s1 + $0xd8] sm:$0xff]
    %v51 = vld [vmem:[%s1 + $0xe0] sm:$0xff]
    %v52 = vld [vmem:[%s1 + $0xe8] sm:$0x1]
    %v53 = vld [vmem:[%s1 + $0xf0] sm:$0xff]
    %v54 = vld [vmem:[%s1 + $0xf8] sm:$0xff]
    %v55 = vld [vmem:[%s1 + $0x100] sm:$0xff]
    %v56 = vld [vmem:[%s1 + $0x108] sm:$0xff]
    %v57 = vld [vmem:[%s1 + $0x110] sm:$0x1]
    %v58 = vld [vmem:[%s1 + $0x118] sm:$0xff]
    %v59 = vld [vmem:[%s1 + $0x120] sm:$0xff]
    %v60 = vld [vmem:[%s1 + $0x128] sm:$0xff]
    %v61 = vld [vmem:[%s1 + $0x130] sm:$0xff]
    %v62 = vld [vmem:[%s1 + $0x138] sm:$0x1]
    %v63 = vld [vmem:[%s1 + $0x140] sm:$0xff]
    %v64 = vld [vmem:[%s1 + $0x148] sm:$0xff]
    %v65 = vld [vmem:[%s1 + $0x150] sm:$0xff]
    %v66 = vld [vmem:[%s1 + $0x158] sm:$0xff]
    %v67 = vld [vmem:[%s1 + $0x160] sm:$0x1]
    %v68 = vld [vmem:[%s1 + $0x168] sm:$0xff]
    %v69 = vld [vmem:[%s1 + $0x170] sm:$0xff]
    %v70 = vld [vmem:[%s1 + $0x178] sm:$0xff]
    %v71 = vld [vmem:[%s1 + $0x180] sm:$0xff]
    %v72 = vld [vmem:[%s1 + $0x188] sm:$0x1]
    %v73 = vld [vmem:[%s1 + $0x190] sm:$0xff]
    %v74 = vld [vmem:[%s1 + $0x198] sm:$0xff]
    %v75 = vld [vmem:[%s1 + $0x1a0] sm:$0xff]
    %v76 = vld [vmem:[%s1 + $0x1a8] sm:$0xff]
    %v77 = vld [vmem:[%s1 + $0x1b0] sm:$0x1]
    %v78 = vld [vmem:[%s1 + $0x1b8] sm:$0xff]
    %v79 = vld [vmem:[%s1 + $0x1c0] sm:$0xff]
    %v80 = vld [vmem:[%s1 + $0x1c8] sm:$0xff]
    %v81 = vld [vmem:[%s1 + $0x1d0] sm:$0xff]
    %v82 = vld [vmem:[%s1 + $0x1d8] sm:$0x1]
    %vm83 = vcmask 269312
    %v85 = vsel %vm83, %v21, 0
    %v88 = vsel %vm83, %v22, 0
    %vm90 = vcmask 1040384
    %v92 = vsel %vm90, %v27, 0
    %94 = vmatprep.subr.mxu0 0.0
    %95 = vmatpush1.msra.mxu0 0.0
    %96 = vmatprep.subr.mxu0 0.0
    %97 = vmatpush1.msra.mxu0 0.0
    %98 = vmatprep.subr.mxu0 0.0
    %99 = vmatpush1.msra.mxu0 0.0
    %100 = vmatprep.subr.mxu0 0.0
    %101 = vmatpush1.msra.mxu0 0.0
    %102 = vmatprep.subr.mxu0 0.0
    %103 = vmatpush1.msra.mxu0 0.0
    %104 = vmatprep.subr.mxu0 0.0
    %105 = vmatpush1.msra.mxu0 0.0
    %106 = vmatprep.subr.mxu0 0.0
    %107 = vmatpush1.msra.mxu0 0.0
    %108 = vmatprep.subr.mxu0 0.0
    %109 = vmatpush1.msra.mxu0 0.0
    %110 = vmatprep.subr.mxu0 0.0
    %111 = vmatpush1.msra.mxu0 0.0
    %112 = vmatprep.subr.mxu0 0.0
    %113 = vmatpush1.msra.mxu0 0.0
    %114 = vmatprep.subr.mxu0 0.0
    %115 = vmatpush1.msra.mxu0 0.0
    %116 = vmatprep.subr.mxu0 0.0
    %117 = vmatpush1.msra.mxu0 %v92
    %118 = vmatprep.subr.mxu0 0.0
    %119 = vmatpush1.msra.mxu0 %v26
    %120 = vmatprep.subr.mxu0 0.0
    %121 = vmatpush1.msra.mxu0 %v25
    %122 = vmatprep.subr.mxu0 0.0
    %123 = vmatpush1.msra.mxu0 %v24
    %124 = vmatprep.subr.mxu0 0.0
    %125 = vmatpush1.msra.mxu0 %v23
    %126 = vmatprep.subr.mxu0 0.0
    %127 = vmatpush2.msra.mxu0 0.0
    %128 = vmatprep.subr.mxu0 0.0
    %129 = vmatpush2.msra.mxu0 0.0
    %130 = vmatprep.subr.mxu0 0.0
    %131 = vmatpush2.msra.mxu0 0.0
    %132 = vmatprep.subr.mxu0 0.0
    %133 = vmatpush2.msra.mxu0 0.0
    %134 = vmatprep.subr.mxu0 0.0
    %135 = vmatpush2.msra.mxu0 0.0
    %136 = vmatprep.subr.mxu0 0.0
    %137 = vmatpush2.msra.mxu0 0.0
    %138 = vmatprep.subr.mxu0 0.0
    %139 = vmatpush2.msra.mxu0 0.0
    %140 = vmatprep.subr.mxu0 0.0
    %141 = vmatpush2.msra.mxu0 0.0
    %142 = vmatprep.subr.mxu0 0.0
    %143 = vmatpush2.msra.mxu0 0.0
    %144 = vmatprep.subr.mxu0 0.0
    %145 = vmatpush2.msra.mxu0 0.0
    %146 = vmatprep.subr.mxu0 0.0
    %147 = vmatpush2.msra.mxu0 0.0
    %148 = vmatprep.subr.mxu0 0.0
    %149 = vmatpush2.msra.mxu0 0.0
    %150 = vmatprep.subr.mxu0 0.0
    %151 = vmatpush2.msra.mxu0 0.0
    %152 = vmatprep.subr.mxu0 0.0
    %153 = vmatpush2.msra.mxu0 0.0
    %154 = vmatprep.subr.mxu0 0.0
    %155 = vmatpush2.msra.mxu0 0.0
    %156 = vmatprep.subr.mxu0 0.0
    %157 = vmatpush2.msra.mxu0 0.0
    %158 = vmatprep.mubr.f32.mxu0 0.0
    %159 = vmatmul.mubr.f32.gmra.mxu0 %v85
    %v160 = vpop.f32.mrf.mxu0
    %v161 = vadd.f32 0.0, %v160
    %v162 = vpop.f32.mrf.mxu0
    %163 = vmatprep.mubr.f32.mxu0 0.0
    %164 = vmatmul.mubr.f32.gmra.mxu0 %v88
    %v165 = vpop.f32.mrf.mxu0
    %v166 = vadd.f32 0.0, %v165
    %v167 = vpop.f32.mrf.mxu0
    %168 = vdwg.mxu0
    %v170 = vsel %vm90, %v32, 0
    %172 = vmatprep.subr.mxu0 0.0
    %173 = vmatpush1.msra.mxu0 0.0
    %174 = vmatprep.subr.mxu0 0.0
    %175 = vmatpush1.msra.mxu0 0.0
    %176 = vmatprep.subr.mxu0 0.0
    %177 = vmatpush1.msra.mxu0 0.0
    %178 = vmatprep.subr.mxu0 0.0
    %179 = vmatpush1.msra.mxu0 0.0
    %180 = vmatprep.subr.mxu0 0.0
    %181 = vmatpush1.msra.mxu0 0.0
    %182 = vmatprep.subr.mxu0 0.0
    %183 = vmatpush1.msra.mxu0 0.0
    %184 = vmatprep.subr.mxu0 0.0
    %185 = vmatpush1.msra.mxu0 0.0
    %186 = vmatprep.subr.mxu0 0.0
    %187 = vmatpush1.msra.mxu0 0.0
    %188 = vmatprep.subr.mxu0 0.0
    %189 = vmatpush1.msra.mxu0 0.0
    %190 = vmatprep.subr.mxu0 0.0
    %191 = vmatpush1.msra.mxu0 0.0
    %192 = vmatprep.subr.mxu0 0.0
    %193 = vmatpush1.msra.mxu0 0.0
    %194 = vmatprep.subr.mxu0 0.0
    %195 = vmatpush1.msra.mxu0 %v170
    %196 = vmatprep.subr.mxu0 0.0
    %197 = vmatpush1.msra.mxu0 %v31
    %198 = vmatprep.subr.mxu0 0.0
    %199 = vmatpush1.msra.mxu0 %v30
    %200 = vmatprep.subr.mxu0 0.0
    %201 = vmatpush1.msra.mxu0 %v29
    %202 = vmatprep.subr.mxu0 0.0
    %203 = vmatpush1.msra.mxu0 %v28
    %204 = vmatprep.subr.mxu0 0.0
    %205 = vmatpush2.msra.mxu0 0.0
    %206 = vmatprep.subr.mxu0 0.0
    %207 = vmatpush2.msra.mxu0 0.0
    %208 = vmatprep.subr.mxu0 0.0
    %209 = vmatpush2.msra.mxu0 0.0
    %210 = vmatprep.subr.mxu0 0.0
    %211 = vmatpush2.msra.mxu0 0.0
    %212 = vmatprep.subr.mxu0 0.0
    %213 = vmatpush2.msra.mxu0 0.0
    %214 = vmatprep.subr.mxu0 0.0
    %215 = vmatpush2.msra.mxu0 0.0
    %216 = vmatprep.subr.mxu0 0.0
    %217 = vmatpush2.msra.mxu0 0.0
    %218 = vmatprep.subr.mxu0 0.0
    %219 = vmatpush2.msra.mxu0 0.0
    %220 = vmatprep.subr.mxu0 0.0
    %221 = vmatpush2.msra.mxu0 0.0
    %222 = vmatprep.subr.mxu0 0.0
    %223 = vmatpush2.msra.mxu0 0.0
    %224 = vmatprep.subr.mxu0 0.0
    %225 = vmatpush2.msra.mxu0 0.0
    %226 = vmatprep.subr.mxu0 0.0
    %227 = vmatpush2.msra.mxu0 0.0
    %228 = vmatprep.subr.mxu0 0.0
    %229 = vmatpush2.msra.mxu0 0.0
    %230 = vmatprep.subr.mxu0 0.0
    %231 = vmatpush2.msra.mxu0 0.0
    %232 = vmatprep.subr.mxu0 0.0
    %233 = vmatpush2.msra.mxu0 0.0
    %234 = vmatprep.subr.mxu0 0.0
    %235 = vmatpush2.msra.mxu0 0.0
    %236 = vmatprep.mubr.f32.mxu0 0.0
    %237 = vmatmul.mubr.f32.gmra.mxu0 %v85
    %v238 = vpop.f32.mrf.mxu0
    %v239 = vadd.f32 0.0, %v238
    %v240 = vpop.f32.mrf.mxu0
    %241 = vmatprep.mubr.f32.mxu0 0.0
    %242 = vmatmul.mubr.f32.gmra.mxu0 %v88
    %v243 = vpop.f32.mrf.mxu0
    %v244 = vadd.f32 0.0, %v243
    %v245 = vpop.f32.mrf.mxu0
    %246 = vdwg.mxu0
    %v248 = vsel %vm90, %v37, 0
    %250 = vmatprep.subr.mxu0 0.0
    %251 = vmatpush1.msra.mxu0 0.0
    %252 = vmatprep.subr.mxu0 0.0
    %253 = vmatpush1.msra.mxu0 0.0
    %254 = vmatprep.subr.mxu0 0.0
    %255 = vmatpush1.msra.mxu0 0.0
    %256 = vmatprep.subr.mxu0 0.0
    %257 = vmatpush1.msra.mxu0 0.0
    %258 = vmatprep.subr.mxu0 0.0
    %259 = vmatpush1.msra.mxu0 0.0
    %260 = vmatprep.subr.mxu0 0.0
    %261 = vmatpush1.msra.mxu0 0.0
    %262 = vmatprep.subr.mxu0 0.0
    %263 = vmatpush1.msra.mxu0 0.0
    %264 = vmatprep.subr.mxu0 0.0
    %265 = vmatpush1.msra.mxu0 0.0
    %266 = vmatprep.subr.mxu0 0.0
    %267 = vmatpush1.msra.mxu0 0.0
    %268 = vmatprep.subr.mxu0 0.0
    %269 = vmatpush1.msra.mxu0 0.0
    %270 = vmatprep.subr.mxu0 0.0
    %271 = vmatpush1.msra.mxu0 0.0
    %272 = vmatprep.subr.mxu0 0.0
    %273 = vmatpush1.msra.mxu0 %v248
    %274 = vmatprep.subr.mxu0 0.0
    %275 = vmatpush1.msra.mxu0 %v36
    %276 = vmatprep.subr.mxu0 0.0
    %277 = vmatpush1.msra.mxu0 %v35
    %278 = vmatprep.subr.mxu0 0.0
    %279 = vmatpush1.msra.mxu0 %v34
    %280 = vmatprep.subr.mxu0 0.0
    %281 = vmatpush1.msra.mxu0 %v33
    %282 = vmatprep.subr.mxu0 0.0
    %283 = vmatpush2.msra.mxu0 0.0
    %284 = vmatprep.subr.mxu0 0.0
    %285 = vmatpush2.msra.mxu0 0.0
    %286 = vmatprep.subr.mxu0 0.0
    %287 = vmatpush2.msra.mxu0 0.0
    %288 = vmatprep.subr.mxu0 0.0
    %289 = vmatpush2.msra.mxu0 0.0
    %290 = vmatprep.subr.mxu0 0.0
    %291 = vmatpush2.msra.mxu0 0.0
    %292 = vmatprep.subr.mxu0 0.0
    %293 = vmatpush2.msra.mxu0 0.0
    %294 = vmatprep.subr.mxu0 0.0
    %295 = vmatpush2.msra.mxu0 0.0
    %296 = vmatprep.subr.mxu0 0.0
    %297 = vmatpush2.msra.mxu0 0.0
    %298 = vmatprep.subr.mxu0 0.0
    %299 = vmatpush2.msra.mxu0 0.0
    %300 = vmatprep.subr.mxu0 0.0
    %301 = vmatpush2.msra.mxu0 0.0
    %302 = vmatprep.subr.mxu0 0.0
    %303 = vmatpush2.msra.mxu0 0.0
    %304 = vmatprep.subr.mxu0 0.0
    %305 = vmatpush2.msra.mxu0 0.0
    %306 = vmatprep.subr.mxu0 0.0
    %307 = vmatpush2.msra.mxu0 0.0
    %308 = vmatprep.subr.mxu0 0.0
    %309 = vmatpush2.msra.mxu0 0.0
    %310 = vmatprep.subr.mxu0 0.0
    %311 = vmatpush2.msra.mxu0 0.0
    %312 = vmatprep.subr.mxu0 0.0
    %313 = vmatpush2.msra.mxu0 0.0
    %314 = vmatprep.mubr.f32.mxu0 0.0
    %315 = vmatmul.mubr.f32.gmra.mxu0 %v85
    %v316 = vpop.f32.mrf.mxu0
    %v317 = vadd.f32 0.0, %v316
    %v318 = vpop.f32.mrf.mxu0
    %319 = vmatprep.mubr.f32.mxu0 0.0
    %320 = vmatmul.mubr.f32.gmra.mxu0 %v88
    %v321 = vpop.f32.mrf.mxu0
    %v322 = vadd.f32 0.0, %v321
    %v323 = vpop.f32.mrf.mxu0
    %324 = vdwg.mxu0
    %v326 = vsel %vm90, %v42, 0
    %328 = vmatprep.subr.mxu0 0.0
    %329 = vmatpush1.msra.mxu0 0.0
    %330 = vmatprep.subr.mxu0 0.0
    %331 = vmatpush1.msra.mxu0 0.0
    %332 = vmatprep.subr.mxu0 0.0
    %333 = vmatpush1.msra.mxu0 0.0
    %334 = vmatprep.subr.mxu0 0.0
    %335 = vmatpush1.msra.mxu0 0.0
    %336 = vmatprep.subr.mxu0 0.0
    %337 = vmatpush1.msra.mxu0 0.0
    %338 = vmatprep.subr.mxu0 0.0
    %339 = vmatpush1.msra.mxu0 0.0
    %340 = vmatprep.subr.mxu0 0.0
    %341 = vmatpush1.msra.mxu0 0.0
    %342 = vmatprep.subr.mxu0 0.0
    %343 = vmatpush1.msra.mxu0 0.0
    %344 = vmatprep.subr.mxu0 0.0
    %345 = vmatpush1.msra.mxu0 0.0
    %346 = vmatprep.subr.mxu0 0.0
    %347 = vmatpush1.msra.mxu0 0.0
    %348 = vmatprep.subr.mxu0 0.0
    %349 = vmatpush1.msra.mxu0 0.0
    %350 = vmatprep.subr.mxu0 0.0
    %351 = vmatpush1.msra.mxu0 %v326
    %352 = vmatprep.subr.mxu0 0.0
    %353 = vmatpush1.msra.mxu0 %v41
    %354 = vmatprep.subr.mxu0 0.0
    %355 = vmatpush1.msra.mxu0 %v40
    %356 = vmatprep.subr.mxu0 0.0
    %357 = vmatpush1.msra.mxu0 %v39
    %358 = vmatprep.subr.mxu0 0.0
    %359 = vmatpush1.msra.mxu0 %v38
    %360 = vmatprep.subr.mxu0 0.0
    %361 = vmatpush2.msra.mxu0 0.0
    %362 = vmatprep.subr.mxu0 0.0
    %363 = vmatpush2.msra.mxu0 0.0
    %364 = vmatprep.subr.mxu0 0.0
    %365 = vmatpush2.msra.mxu0 0.0
    %366 = vmatprep.subr.mxu0 0.0
    %367 = vmatpush2.msra.mxu0 0.0
    %368 = vmatprep.subr.mxu0 0.0
    %369 = vmatpush2.msra.mxu0 0.0
    %370 = vmatprep.subr.mxu0 0.0
    %371 = vmatpush2.msra.mxu0 0.0
    %372 = vmatprep.subr.mxu0 0.0
    %373 = vmatpush2.msra.mxu0 0.0
    %374 = vmatprep.subr.mxu0 0.0
    %375 = vmatpush2.msra.mxu0 0.0
    %376 = vmatprep.subr.mxu0 0.0
    %377 = vmatpush2.msra.mxu0 0.0
    %378 = vmatprep.subr.mxu0 0.0
    %379 = vmatpush2.msra.mxu0 0.0
    %380 = vmatprep.subr.mxu0 0.0
    %381 = vmatpush2.msra.mxu0 0.0
    %382 = vmatprep.subr.mxu0 0.0
    %383 = vmatpush2.msra.mxu0 0.0
    %384 = vmatprep.subr.mxu0 0.0
    %385 = vmatpush2.msra.mxu0 0.0
    %386 = vmatprep.subr.mxu0 0.0
    %387 = vmatpush2.msra.mxu0 0.0
    %388 = vmatprep.subr.mxu0 0.0
    %389 = vmatpush2.msra.mxu0 0.0
    %390 = vmatprep.subr.mxu0 0.0
    %391 = vmatpush2.msra.mxu0 0.0
    %392 = vmatprep.mubr.f32.mxu0 0.0
    %393 = vmatmul.mubr.f32.gmra.mxu0 %v85
    %v394 = vpop.f32.mrf.mxu0
    %v395 = vadd.f32 0.0, %v394
    %v396 = vpop.f32.mrf.mxu0
    %397 = vmatprep.mubr.f32.mxu0 0.0
    %398 = vmatmul.mubr.f32.gmra.mxu0 %v88
    %v399 = vpop.f32.mrf.mxu0
    %v400 = vadd.f32 0.0, %v399
    %v401 = vpop.f32.mrf.mxu0
    %402 = vdwg.mxu0
    %v404 = vsel %vm90, %v47, 0
    %406 = vmatprep.subr.mxu0 0.0
    %407 = vmatpush1.msra.mxu0 0.0
    %408 = vmatprep.subr.mxu0 0.0
    %409 = vmatpush1.msra.mxu0 0.0
    %410 = vmatprep.subr.mxu0 0.0
    %411 = vmatpush1.msra.mxu0 0.0
    %412 = vmatprep.subr.mxu0 0.0
    %413 = vmatpush1.msra.mxu0 0.0
    %414 = vmatprep.subr.mxu0 0.0
    %415 = vmatpush1.msra.mxu0 0.0
    %416 = vmatprep.subr.mxu0 0.0
    %417 = vmatpush1.msra.mxu0 0.0
    %418 = vmatprep.subr.mxu0 0.0
    %419 = vmatpush1.msra.mxu0 0.0
    %420 = vmatprep.subr.mxu0 0.0
    %421 = vmatpush1.msra.mxu0 0.0
    %422 = vmatprep.subr.mxu0 0.0
    %423 = vmatpush1.msra.mxu0 0.0
    %424 = vmatprep.subr.mxu0 0.0
    %425 = vmatpush1.msra.mxu0 0.0
    %426 = vmatprep.subr.mxu0 0.0
    %427 = vmatpush1.msra.mxu0 0.0
    %428 = vmatprep.subr.mxu0 0.0
    %429 = vmatpush1.msra.mxu0 %v404
    %430 = vmatprep.subr.mxu0 0.0
    %431 = vmatpush1.msra.mxu0 %v46
    %432 = vmatprep.subr.mxu0 0.0
    %433 = vmatpush1.msra.mxu0 %v45
    %434 = vmatprep.subr.mxu0 0.0
    %435 = vmatpush1.msra.mxu0 %v44
    %436 = vmatprep.subr.mxu0 0.0
    %437 = vmatpush1.msra.mxu0 %v43
    %438 = vmatprep.subr.mxu0 0.0
    %439 = vmatpush2.msra.mxu0 0.0
    %440 = vmatprep.subr.mxu0 0.0
    %441 = vmatpush2.msra.mxu0 0.0
    %442 = vmatprep.subr.mxu0 0.0
    %443 = vmatpush2.msra.mxu0 0.0
    %444 = vmatprep.subr.mxu0 0.0
    %445 = vmatpush2.msra.mxu0 0.0
    %446 = vmatprep.subr.mxu0 0.0
    %447 = vmatpush2.msra.mxu0 0.0
    %448 = vmatprep.subr.mxu0 0.0
    %449 = vmatpush2.msra.mxu0 0.0
    %450 = vmatprep.subr.mxu0 0.0
    %451 = vmatpush2.msra.mxu0 0.0
    %452 = vmatprep.subr.mxu0 0.0
    %453 = vmatpush2.msra.mxu0 0.0
    %454 = vmatprep.subr.mxu0 0.0
    %455 = vmatpush2.msra.mxu0 0.0
    %456 = vmatprep.subr.mxu0 0.0
    %457 = vmatpush2.msra.mxu0 0.0
    %458 = vmatprep.subr.mxu0 0.0
    %459 = vmatpush2.msra.mxu0 0.0
    %460 = vmatprep.subr.mxu0 0.0
    %461 = vmatpush2.msra.mxu0 0.0
    %462 = vmatprep.subr.mxu0 0.0
    %463 = vmatpush2.msra.mxu0 0.0
    %464 = vmatprep.subr.mxu0 0.0
    %465 = vmatpush2.msra.mxu0 0.0
    %466 = vmatprep.subr.mxu0 0.0
    %467 = vmatpush2.msra.mxu0 0.0
    %468 = vmatprep.subr.mxu0 0.0
    %469 = vmatpush2.msra.mxu0 0.0
    %470 = vmatprep.mubr.f32.mxu0 0.0
    %471 = vmatmul.mubr.f32.gmra.mxu0 %v85
    %v472 = vpop.f32.mrf.mxu0
    %v473 = vadd.f32 0.0, %v472
    %v474 = vpop.f32.mrf.mxu0
    %475 = vmatprep.mubr.f32.mxu0 0.0
    %476 = vmatmul.mubr.f32.gmra.mxu0 %v88
    %v477 = vpop.f32.mrf.mxu0
    %v478 = vadd.f32 0.0, %v477
    %v479 = vpop.f32.mrf.mxu0
    %480 = vdwg.mxu0
    %v482 = vsel %vm90, %v52, 0
    %484 = vmatprep.subr.mxu0 0.0
    %485 = vmatpush1.msra.mxu0 0.0
    %486 = vmatprep.subr.mxu0 0.0
    %487 = vmatpush1.msra.mxu0 0.0
    %488 = vmatprep.subr.mxu0 0.0
    %489 = vmatpush1.msra.mxu0 0.0
    %490 = vmatprep.subr.mxu0 0.0
    %491 = vmatpush1.msra.mxu0 0.0
    %492 = vmatprep.subr.mxu0 0.0
    %493 = vmatpush1.msra.mxu0 0.0
    %494 = vmatprep.subr.mxu0 0.0
    %495 = vmatpush1.msra.mxu0 0.0
    %496 = vmatprep.subr.mxu0 0.0
    %497 = vmatpush1.msra.mxu0 0.0
    %498 = vmatprep.subr.mxu0 0.0
    %499 = vmatpush1.msra.mxu0 0.0
    %500 = vmatprep.subr.mxu0 0.0
    %501 = vmatpush1.msra.mxu0 0.0
    %502 = vmatprep.subr.mxu0 0.0
    %503 = vmatpush1.msra.mxu0 0.0
    %504 = vmatprep.subr.mxu0 0.0
    %505 = vmatpush1.msra.mxu0 0.0
    %506 = vmatprep.subr.mxu0 0.0
    %507 = vmatpush1.msra.mxu0 %v482
    %508 = vmatprep.subr.mxu0 0.0
    %509 = vmatpush1.msra.mxu0 %v51
    %510 = vmatprep.subr.mxu0 0.0
    %511 = vmatpush1.msra.mxu0 %v50
    %512 = vmatprep.subr.mxu0 0.0
    %513 = vmatpush1.msra.mxu0 %v49
    %514 = vmatprep.subr.mxu0 0.0
    %515 = vmatpush1.msra.mxu0 %v48
    %516 = vmatprep.subr.mxu0 0.0
    %517 = vmatpush2.msra.mxu0 0.0
    %518 = vmatprep.subr.mxu0 0.0
    %519 = vmatpush2.msra.mxu0 0.0
    %520 = vmatprep.subr.mxu0 0.0
    %521 = vmatpush2.msra.mxu0 0.0
    %522 = vmatprep.subr.mxu0 0.0
    %523 = vmatpush2.msra.mxu0 0.0
    %524 = vmatprep.subr.mxu0 0.0
    %525 = vmatpush2.msra.mxu0 0.0
    %526 = vmatprep.subr.mxu0 0.0
    %527 = vmatpush2.msra.mxu0 0.0
    %528 = vmatprep.subr.mxu0 0.0
    %529 = vmatpush2.msra.mxu0 0.0
    %530 = vmatprep.subr.mxu0 0.0
    %531 = vmatpush2.msra.mxu0 0.0
    %532 = vmatprep.subr.mxu0 0.0
    %533 = vmatpush2.msra.mxu0 0.0
    %534 = vmatprep.subr.mxu0 0.0
    %535 = vmatpush2.msra.mxu0 0.0
    %536 = vmatprep.subr.mxu0 0.0
    %537 = vmatpush2.msra.mxu0 0.0
    %538 = vmatprep.subr.mxu0 0.0
    %539 = vmatpush2.msra.mxu0 0.0
    %540 = vmatprep.subr.mxu0 0.0
    %541 = vmatpush2.msra.mxu0 0.0
    %542 = vmatprep.subr.mxu0 0.0
    %543 = vmatpush2.msra.mxu0 0.0
    %544 = vmatprep.subr.mxu0 0.0
    %545 = vmatpush2.msra.mxu0 0.0
    %546 = vmatprep.subr.mxu0 0.0
    %547 = vmatpush2.msra.mxu0 0.0
    %548 = vmatprep.mubr.f32.mxu0 0.0
    %549 = vmatmul.mubr.f32.gmra.mxu0 %v85
    %v550 = vpop.f32.mrf.mxu0
    %v551 = vadd.f32 0.0, %v550
    %v552 = vpop.f32.mrf.mxu0
    %553 = vmatprep.mubr.f32.mxu0 0.0
    %554 = vmatmul.mubr.f32.gmra.mxu0 %v88
    %v555 = vpop.f32.mrf.mxu0
    %v556 = vadd.f32 0.0, %v555
    %v557 = vpop.f32.mrf.mxu0
    %558 = vdwg.mxu0
    %v560 = vsel %vm90, %v57, 0
    %562 = vmatprep.subr.mxu0 0.0
    %563 = vmatpush1.msra.mxu0 0.0
    %564 = vmatprep.subr.mxu0 0.0
    %565 = vmatpush1.msra.mxu0 0.0
    %566 = vmatprep.subr.mxu0 0.0
    %567 = vmatpush1.msra.mxu0 0.0
    %568 = vmatprep.subr.mxu0 0.0
    %569 = vmatpush1.msra.mxu0 0.0
    %570 = vmatprep.subr.mxu0 0.0
    %571 = vmatpush1.msra.mxu0 0.0
    %572 = vmatprep.subr.mxu0 0.0
    %573 = vmatpush1.msra.mxu0 0.0
    %574 = vmatprep.subr.mxu0 0.0
    %575 = vmatpush1.msra.mxu0 0.0
    %576 = vmatprep.subr.mxu0 0.0
    %577 = vmatpush1.msra.mxu0 0.0
    %578 = vmatprep.subr.mxu0 0.0
    %579 = vmatpush1.msra.mxu0 0.0
    %580 = vmatprep.subr.mxu0 0.0
    %581 = vmatpush1.msra.mxu0 0.0
    %582 = vmatprep.subr.mxu0 0.0
    %583 = vmatpush1.msra.mxu0 0.0
    %584 = vmatprep.subr.mxu0 0.0
    %585 = vmatpush1.msra.mxu0 %v560
    %586 = vmatprep.subr.mxu0 0.0
    %587 = vmatpush1.msra.mxu0 %v56
    %588 = vmatprep.subr.mxu0 0.0
    %589 = vmatpush1.msra.mxu0 %v55
    %590 = vmatprep.subr.mxu0 0.0
    %591 = vmatpush1.msra.mxu0 %v54
    %592 = vmatprep.subr.mxu0 0.0
    %593 = vmatpush1.msra.mxu0 %v53
    %594 = vmatprep.subr.mxu0 0.0
    %595 = vmatpush2.msra.mxu0 0.0
    %596 = vmatprep.subr.mxu0 0.0
    %597 = vmatpush2.msra.mxu0 0.0
    %598 = vmatprep.subr.mxu0 0.0
    %599 = vmatpush2.msra.mxu0 0.0
    %600 = vmatprep.subr.mxu0 0.0
    %601 = vmatpush2.msra.mxu0 0.0
    %602 = vmatprep.subr.mxu0 0.0
    %603 = vmatpush2.msra.mxu0 0.0
    %604 = vmatprep.subr.mxu0 0.0
    %605 = vmatpush2.msra.mxu0 0.0
    %606 = vmatprep.subr.mxu0 0.0
    %607 = vmatpush2.msra.mxu0 0.0
    %608 = vmatprep.subr.mxu0 0.0
    %609 = vmatpush2.msra.mxu0 0.0
    %610 = vmatprep.subr.mxu0 0.0
    %611 = vmatpush2.msra.mxu0 0.0
    %612 = vmatprep.subr.mxu0 0.0
    %613 = vmatpush2.msra.mxu0 0.0
    %614 = vmatprep.subr.mxu0 0.0
    %615 = vmatpush2.msra.mxu0 0.0
    %616 = vmatprep.subr.mxu0 0.0
    %617 = vmatpush2.msra.mxu0 0.0
    %618 = vmatprep.subr.mxu0 0.0
    %619 = vmatpush2.msra.mxu0 0.0
    %620 = vmatprep.subr.mxu0 0.0
    %621 = vmatpush2.msra.mxu0 0.0
    %622 = vmatprep.subr.mxu0 0.0
    %623 = vmatpush2.msra.mxu0 0.0
    %624 = vmatprep.subr.mxu0 0.0
    %625 = vmatpush2.msra.mxu0 0.0
    %626 = vmatprep.mubr.f32.mxu0 0.0
    %627 = vmatmul.mubr.f32.gmra.mxu0 %v85
    %v628 = vpop.f32.mrf.mxu0
    %v629 = vadd.f32 0.0, %v628
    %v630 = vpop.f32.mrf.mxu0
    %631 = vmatprep.mubr.f32.mxu0 0.0
    %632 = vmatmul.mubr.f32.gmra.mxu0 %v88
    %v633 = vpop.f32.mrf.mxu0
    %v634 = vadd.f32 0.0, %v633
    %v635 = vpop.f32.mrf.mxu0
    %636 = vdwg.mxu0
    %v638 = vsel %vm90, %v62, 0
    %640 = vmatprep.subr.mxu0 0.0
    %641 = vmatpush1.msra.mxu0 0.0
    %642 = vmatprep.subr.mxu0 0.0
    %643 = vmatpush1.msra.mxu0 0.0
    %644 = vmatprep.subr.mxu0 0.0
    %645 = vmatpush1.msra.mxu0 0.0
    %646 = vmatprep.subr.mxu0 0.0
    %647 = vmatpush1.msra.mxu0 0.0
    %648 = vmatprep.subr.mxu0 0.0
    %649 = vmatpush1.msra.mxu0 0.0
    %650 = vmatprep.subr.mxu0 0.0
    %651 = vmatpush1.msra.mxu0 0.0
    %652 = vmatprep.subr.mxu0 0.0
    %653 = vmatpush1.msra.mxu0 0.0
    %654 = vmatprep.subr.mxu0 0.0
    %655 = vmatpush1.msra.mxu0 0.0
    %656 = vmatprep.subr.mxu0 0.0
    %657 = vmatpush1.msra.mxu0 0.0
    %658 = vmatprep.subr.mxu0 0.0
    %659 = vmatpush1.msra.mxu0 0.0
    %660 = vmatprep.subr.mxu0 0.0
    %661 = vmatpush1.msra.mxu0 0.0
    %662 = vmatprep.subr.mxu0 0.0
    %663 = vmatpush1.msra.mxu0 %v638
    %664 = vmatprep.subr.mxu0 0.0
    %665 = vmatpush1.msra.mxu0 %v61
    %666 = vmatprep.subr.mxu0 0.0
    %667 = vmatpush1.msra.mxu0 %v60
    %668 = vmatprep.subr.mxu0 0.0
    %669 = vmatpush1.msra.mxu0 %v59
    %670 = vmatprep.subr.mxu0 0.0
    %671 = vmatpush1.msra.mxu0 %v58
    %672 = vmatprep.subr.mxu0 0.0
    %673 = vmatpush2.msra.mxu0 0.0
    %674 = vmatprep.subr.mxu0 0.0
    %675 = vmatpush2.msra.mxu0 0.0
    %676 = vmatprep.subr.mxu0 0.0
    %677 = vmatpush2.msra.mxu0 0.0
    %678 = vmatprep.subr.mxu0 0.0
    %679 = vmatpush2.msra.mxu0 0.0
    %680 = vmatprep.subr.mxu0 0.0
    %681 = vmatpush2.msra.mxu0 0.0
    %682 = vmatprep.subr.mxu0 0.0
    %683 = vmatpush2.msra.mxu0 0.0
    %684 = vmatprep.subr.mxu0 0.0
    %685 = vmatpush2.msra.mxu0 0.0
    %686 = vmatprep.subr.mxu0 0.0
    %687 = vmatpush2.msra.mxu0 0.0
    %688 = vmatprep.subr.mxu0 0.0
    %689 = vmatpush2.msra.mxu0 0.0
    %690 = vmatprep.subr.mxu0 0.0
    %691 = vmatpush2.msra.mxu0 0.0
    %692 = vmatprep.subr.mxu0 0.0
    %693 = vmatpush2.msra.mxu0 0.0
    %694 = vmatprep.subr.mxu0 0.0
    %695 = vmatpush2.msra.mxu0 0.0
    %696 = vmatprep.subr.mxu0 0.0
    %697 = vmatpush2.msra.mxu0 0.0
    %698 = vmatprep.subr.mxu0 0.0
    %699 = vmatpush2.msra.mxu0 0.0
    %700 = vmatprep.subr.mxu0 0.0
    %701 = vmatpush2.msra.mxu0 0.0
    %702 = vmatprep.subr.mxu0 0.0
    %703 = vmatpush2.msra.mxu0 0.0
    %704 = vmatprep.mubr.f32.mxu0 0.0
    %705 = vmatmul.mubr.f32.gmra.mxu0 %v85
    %v706 = vpop.f32.mrf.mxu0
    %v707 = vadd.f32 0.0, %v706
    %v708 = vpop.f32.mrf.mxu0
    %709 = vmatprep.mubr.f32.mxu0 0.0
    %710 = vmatmul.mubr.f32.gmra.mxu0 %v88
    %v711 = vpop.f32.mrf.mxu0
    %v712 = vadd.f32 0.0, %v711
    %v713 = vpop.f32.mrf.mxu0
    %714 = vdwg.mxu0
    %v716 = vsel %vm90, %v67, 0
    %718 = vmatprep.subr.mxu0 0.0
    %719 = vmatpush1.msra.mxu0 0.0
    %720 = vmatprep.subr.mxu0 0.0
    %721 = vmatpush1.msra.mxu0 0.0
    %722 = vmatprep.subr.mxu0 0.0
    %723 = vmatpush1.msra.mxu0 0.0
    %724 = vmatprep.subr.mxu0 0.0
    %725 = vmatpush1.msra.mxu0 0.0
    %726 = vmatprep.subr.mxu0 0.0
    %727 = vmatpush1.msra.mxu0 0.0
    %728 = vmatprep.subr.mxu0 0.0
    %729 = vmatpush1.msra.mxu0 0.0
    %730 = vmatprep.subr.mxu0 0.0
    %731 = vmatpush1.msra.mxu0 0.0
    %732 = vmatprep.subr.mxu0 0.0
    %733 = vmatpush1.msra.mxu0 0.0
    %734 = vmatprep.subr.mxu0 0.0
    %735 = vmatpush1.msra.mxu0 0.0
    %736 = vmatprep.subr.mxu0 0.0
    %737 = vmatpush1.msra.mxu0 0.0
    %738 = vmatprep.subr.mxu0 0.0
    %739 = vmatpush1.msra.mxu0 0.0
    %740 = vmatprep.subr.mxu0 0.0
    %741 = vmatpush1.msra.mxu0 %v716
    %742 = vmatprep.subr.mxu0 0.0
    %743 = vmatpush1.msra.mxu0 %v66
    %744 = vmatprep.subr.mxu0 0.0
    %745 = vmatpush1.msra.mxu0 %v65
    %746 = vmatprep.subr.mxu0 0.0
    %747 = vmatpush1.msra.mxu0 %v64
    %748 = vmatprep.subr.mxu0 0.0
    %749 = vmatpush1.msra.mxu0 %v63
    %750 = vmatprep.subr.mxu0 0.0
    %751 = vmatpush2.msra.mxu0 0.0
    %752 = vmatprep.subr.mxu0 0.0
    %753 = vmatpush2.msra.mxu0 0.0
    %754 = vmatprep.subr.mxu0 0.0
    %755 = vmatpush2.msra.mxu0 0.0
    %756 = vmatprep.subr.mxu0 0.0
    %757 = vmatpush2.msra.mxu0 0.0
    %758 = vmatprep.subr.mxu0 0.0
    %759 = vmatpush2.msra.mxu0 0.0
    %760 = vmatprep.subr.mxu0 0.0
    %761 = vmatpush2.msra.mxu0 0.0
    %762 = vmatprep.subr.mxu0 0.0
    %763 = vmatpush2.msra.mxu0 0.0
    %764 = vmatprep.subr.mxu0 0.0
    %765 = vmatpush2.msra.mxu0 0.0
    %766 = vmatprep.subr.mxu0 0.0
    %767 = vmatpush2.msra.mxu0 0.0
    %768 = vmatprep.subr.mxu0 0.0
    %769 = vmatpush2.msra.mxu0 0.0
    %770 = vmatprep.subr.mxu0 0.0
    %771 = vmatpush2.msra.mxu0 0.0
    %772 = vmatprep.subr.mxu0 0.0
    %773 = vmatpush2.msra.mxu0 0.0
    %774 = vmatprep.subr.mxu0 0.0
    %775 = vmatpush2.msra.mxu0 0.0
    %776 = vmatprep.subr.mxu0 0.0
    %777 = vmatpush2.msra.mxu0 0.0
    %778 = vmatprep.subr.mxu0 0.0
    %779 = vmatpush2.msra.mxu0 0.0
    %780 = vmatprep.subr.mxu0 0.0
    %781 = vmatpush2.msra.mxu0 0.0
    %782 = vmatprep.mubr.f32.mxu0 0.0
    %783 = vmatmul.mubr.f32.gmra.mxu0 %v85
    %v784 = vpop.f32.mrf.mxu0
    %v785 = vadd.f32 0.0, %v784
    %v786 = vpop.f32.mrf.mxu0
    %787 = vmatprep.mubr.f32.mxu0 0.0
    %788 = vmatmul.mubr.f32.gmra.mxu0 %v88
    %v789 = vpop.f32.mrf.mxu0
    %v790 = vadd.f32 0.0, %v789
    %v791 = vpop.f32.mrf.mxu0
    %792 = vdwg.mxu0
    %v794 = vsel %vm90, %v72, 0
    %796 = vmatprep.subr.mxu0 0.0
    %797 = vmatpush1.msra.mxu0 0.0
    %798 = vmatprep.subr.mxu0 0.0
    %799 = vmatpush1.msra.mxu0 0.0
    %800 = vmatprep.subr.mxu0 0.0
    %801 = vmatpush1.msra.mxu0 0.0
    %802 = vmatprep.subr.mxu0 0.0
    %803 = vmatpush1.msra.mxu0 0.0
    %804 = vmatprep.subr.mxu0 0.0
    %805 = vmatpush1.msra.mxu0 0.0
    %806 = vmatprep.subr.mxu0 0.0
    %807 = vmatpush1.msra.mxu0 0.0
    %808 = vmatprep.subr.mxu0 0.0
    %809 = vmatpush1.msra.mxu0 0.0
    %810 = vmatprep.subr.mxu0 0.0
    %811 = vmatpush1.msra.mxu0 0.0
    %812 = vmatprep.subr.mxu0 0.0
    %813 = vmatpush1.msra.mxu0 0.0
    %814 = vmatprep.subr.mxu0 0.0
    %815 = vmatpush1.msra.mxu0 0.0
    %816 = vmatprep.subr.mxu0 0.0
    %817 = vmatpush1.msra.mxu0 0.0
    %818 = vmatprep.subr.mxu0 0.0
    %819 = vmatpush1.msra.mxu0 %v794
    %820 = vmatprep.subr.mxu0 0.0
    %821 = vmatpush1.msra.mxu0 %v71
    %822 = vmatprep.subr.mxu0 0.0
    %823 = vmatpush1.msra.mxu0 %v70
    %824 = vmatprep.subr.mxu0 0.0
    %825 = vmatpush1.msra.mxu0 %v69
    %826 = vmatprep.subr.mxu0 0.0
    %827 = vmatpush1.msra.mxu0 %v68
    %828 = vmatprep.subr.mxu0 0.0
    %829 = vmatpush2.msra.mxu0 0.0
    %830 = vmatprep.subr.mxu0 0.0
    %831 = vmatpush2.msra.mxu0 0.0
    %832 = vmatprep.subr.mxu0 0.0
    %833 = vmatpush2.msra.mxu0 0.0
    %834 = vmatprep.subr.mxu0 0.0
    %835 = vmatpush2.msra.mxu0 0.0
    %836 = vmatprep.subr.mxu0 0.0
    %837 = vmatpush2.msra.mxu0 0.0
    %838 = vmatprep.subr.mxu0 0.0
    %839 = vmatpush2.msra.mxu0 0.0
    %840 = vmatprep.subr.mxu0 0.0
    %841 = vmatpush2.msra.mxu0 0.0
    %842 = vmatprep.subr.mxu0 0.0
    %843 = vmatpush2.msra.mxu0 0.0
    %844 = vmatprep.subr.mxu0 0.0
    %845 = vmatpush2.msra.mxu0 0.0
    %846 = vmatprep.subr.mxu0 0.0
    %847 = vmatpush2.msra.mxu0 0.0
    %848 = vmatprep.subr.mxu0 0.0
    %849 = vmatpush2.msra.mxu0 0.0
    %850 = vmatprep.subr.mxu0 0.0
    %851 = vmatpush2.msra.mxu0 0.0
    %852 = vmatprep.subr.mxu0 0.0
    %853 = vmatpush2.msra.mxu0 0.0
    %854 = vmatprep.subr.mxu0 0.0
    %855 = vmatpush2.msra.mxu0 0.0
    %856 = vmatprep.subr.mxu0 0.0
    %857 = vmatpush2.msra.mxu0 0.0
    %858 = vmatprep.subr.mxu0 0.0
    %859 = vmatpush2.msra.mxu0 0.0
    %860 = vmatprep.mubr.f32.mxu0 0.0
    %861 = vmatmul.mubr.f32.gmra.mxu0 %v85
    %v862 = vpop.f32.mrf.mxu0
    %v863 = vadd.f32 0.0, %v862
    %v864 = vpop.f32.mrf.mxu0
    %865 = vmatprep.mubr.f32.mxu0 0.0
    %866 = vmatmul.mubr.f32.gmra.mxu0 %v88
    %v867 = vpop.f32.mrf.mxu0
    %v868 = vadd.f32 0.0, %v867
    %v869 = vpop.f32.mrf.mxu0
    %870 = vdwg.mxu0
    %v872 = vsel %vm90, %v77, 0
    %874 = vmatprep.subr.mxu0 0.0
    %875 = vmatpush1.msra.mxu0 0.0
    %876 = vmatprep.subr.mxu0 0.0
    %877 = vmatpush1.msra.mxu0 0.0
    %878 = vmatprep.subr.mxu0 0.0
    %879 = vmatpush1.msra.mxu0 0.0
    %880 = vmatprep.subr.mxu0 0.0
    %881 = vmatpush1.msra.mxu0 0.0
    %882 = vmatprep.subr.mxu0 0.0
    %883 = vmatpush1.msra.mxu0 0.0
    %884 = vmatprep.subr.mxu0 0.0
    %885 = vmatpush1.msra.mxu0 0.0
    %886 = vmatprep.subr.mxu0 0.0
    %887 = vmatpush1.msra.mxu0 0.0
    %888 = vmatprep.subr.mxu0 0.0
    %889 = vmatpush1.msra.mxu0 0.0
    %890 = vmatprep.subr.mxu0 0.0
    %891 = vmatpush1.msra.mxu0 0.0
    %892 = vmatprep.subr.mxu0 0.0
    %893 = vmatpush1.msra.mxu0 0.0
    %894 = vmatprep.subr.mxu0 0.0
    %895 = vmatpush1.msra.mxu0 0.0
    %896 = vmatprep.subr.mxu0 0.0
    %897 = vmatpush1.msra.mxu0 %v872
    %898 = vmatprep.subr.mxu0 0.0
    %899 = vmatpush1.msra.mxu0 %v76
    %900 = vmatprep.subr.mxu0 0.0
    %901 = vmatpush1.msra.mxu0 %v75
    %902 = vmatprep.subr.mxu0 0.0
    %903 = vmatpush1.msra.mxu0 %v74
    %904 = vmatprep.subr.mxu0 0.0
    %905 = vmatpush1.msra.mxu0 %v73
    %906 = vmatprep.subr.mxu0 0.0
    %907 = vmatpush2.msra.mxu0 0.0
    %908 = vmatprep.subr.mxu0 0.0
    %909 = vmatpush2.msra.mxu0 0.0
    %910 = vmatprep.subr.mxu0 0.0
    %911 = vmatpush2.msra.mxu0 0.0
    %912 = vmatprep.subr.mxu0 0.0
    %913 = vmatpush2.msra.mxu0 0.0
    %914 = vmatprep.subr.mxu0 0.0
    %915 = vmatpush2.msra.mxu0 0.0
    %916 = vmatprep.subr.mxu0 0.0
    %917 = vmatpush2.msra.mxu0 0.0
    %918 = vmatprep.subr.mxu0 0.0
    %919 = vmatpush2.msra.mxu0 0.0
    %920 = vmatprep.subr.mxu0 0.0
    %921 = vmatpush2.msra.mxu0 0.0
    %922 = vmatprep.subr.mxu0 0.0
    %923 = vmatpush2.msra.mxu0 0.0
    %924 = vmatprep.subr.mxu0 0.0
    %925 = vmatpush2.msra.mxu0 0.0
    %926 = vmatprep.subr.mxu0 0.0
    %927 = vmatpush2.msra.mxu0 0.0
    %928 = vmatprep.subr.mxu0 0.0
    %929 = vmatpush2.msra.mxu0 0.0
    %930 = vmatprep.subr.mxu0 0.0
    %931 = vmatpush2.msra.mxu0 0.0
    %932 = vmatprep.subr.mxu0 0.0
    %933 = vmatpush2.msra.mxu0 0.0
    %934 = vmatprep.subr.mxu0 0.0
    %935 = vmatpush2.msra.mxu0 0.0
    %936 = vmatprep.subr.mxu0 0.0
    %937 = vmatpush2.msra.mxu0 0.0
    %938 = vmatprep.mubr.f32.mxu0 0.0
    %939 = vmatmul.mubr.f32.gmra.mxu0 %v85
    %v940 = vpop.f32.mrf.mxu0
    %v941 = vadd.f32 0.0, %v940
    %v942 = vpop.f32.mrf.mxu0
    %943 = vmatprep.mubr.f32.mxu0 0.0
    %944 = vmatmul.mubr.f32.gmra.mxu0 %v88
    %v945 = vpop.f32.mrf.mxu0
    %v946 = vadd.f32 0.0, %v945
    %v947 = vpop.f32.mrf.mxu0
    %948 = vdwg.mxu0
    %v950 = vsel %vm90, %v82, 0
    %952 = vmatprep.subr.mxu0 0.0
    %953 = vmatpush1.msra.mxu0 0.0
    %954 = vmatprep.subr.mxu0 0.0
    %955 = vmatpush1.msra.mxu0 0.0
    %956 = vmatprep.subr.mxu0 0.0
    %957 = vmatpush1.msra.mxu0 0.0
    %958 = vmatprep.subr.mxu0 0.0
    %959 = vmatpush1.msra.mxu0 0.0
    %960 = vmatprep.subr.mxu0 0.0
    %961 = vmatpush1.msra.mxu0 0.0
    %962 = vmatprep.subr.mxu0 0.0
    %963 = vmatpush1.msra.mxu0 0.0
    %964 = vmatprep.subr.mxu0 0.0
    %965 = vmatpush1.msra.mxu0 0.0
    %966 = vmatprep.subr.mxu0 0.0
    %967 = vmatpush1.msra.mxu0 0.0
    %968 = vmatprep.subr.mxu0 0.0
    %969 = vmatpush1.msra.mxu0 0.0
    %970 = vmatprep.subr.mxu0 0.0
    %971 = vmatpush1.msra.mxu0 0.0
    %972 = vmatprep.subr.mxu0 0.0
    %973 = vmatpush1.msra.mxu0 0.0
    %974 = vmatprep.subr.mxu0 0.0
    %975 = vmatpush1.msra.mxu0 %v950
    %976 = vmatprep.subr.mxu0 0.0
    %977 = vmatpush1.msra.mxu0 %v81
    %978 = vmatprep.subr.mxu0 0.0
    %979 = vmatpush1.msra.mxu0 %v80
    %980 = vmatprep.subr.mxu0 0.0
    %981 = vmatpush1.msra.mxu0 %v79
    %982 = vmatprep.subr.mxu0 0.0
    %983 = vmatpush1.msra.mxu0 %v78
    %984 = vmatprep.subr.mxu0 0.0
    %985 = vmatpush2.msra.mxu0 0.0
    %986 = vmatprep.subr.mxu0 0.0
    %987 = vmatpush2.msra.mxu0 0.0
    %988 = vmatprep.subr.mxu0 0.0
    %989 = vmatpush2.msra.mxu0 0.0
    %990 = vmatprep.subr.mxu0 0.0
    %991 = vmatpush2.msra.mxu0 0.0
    %992 = vmatprep.subr.mxu0 0.0
    %993 = vmatpush2.msra.mxu0 0.0
    %994 = vmatprep.subr.mxu0 0.0
    %995 = vmatpush2.msra.mxu0 0.0
    %996 = vmatprep.subr.mxu0 0.0
    %997 = vmatpush2.msra.mxu0 0.0
    %998 = vmatprep.subr.mxu0 0.0
    %999 = vmatpush2.msra.mxu0 0.0
    %1000 = vmatprep.subr.mxu0 0.0
    %1001 = vmatpush2.msra.mxu0 0.0
    %1002 = vmatprep.subr.mxu0 0.0
    %1003 = vmatpush2.msra.mxu0 0.0
    %1004 = vmatprep.subr.mxu0 0.0
    %1005 = vmatpush2.msra.mxu0 0.0
    %1006 = vmatprep.subr.mxu0 0.0
    %1007 = vmatpush2.msra.mxu0 0.0
    %1008 = vmatprep.subr.mxu0 0.0
    %1009 = vmatpush2.msra.mxu0 0.0
    %1010 = vmatprep.subr.mxu0 0.0
    %1011 = vmatpush2.msra.mxu0 0.0
    %1012 = vmatprep.subr.mxu0 0.0
    %1013 = vmatpush2.msra.mxu0 0.0
    %1014 = vmatprep.subr.mxu0 0.0
    %1015 = vmatpush2.msra.mxu0 0.0
    %1016 = vmatprep.mubr.f32.mxu0 0.0
    %1017 = vmatmul.mubr.f32.gmra.mxu0 %v85
    %v1018 = vpop.f32.mrf.mxu0
    %v1019 = vadd.f32 0.0, %v1018
    %v1020 = vpop.f32.mrf.mxu0
    %1021 = vmatprep.mubr.f32.mxu0 0.0
    %1022 = vmatmul.mubr.f32.gmra.mxu0 %v88
    %v1023 = vpop.f32.mrf.mxu0
    %v1024 = vadd.f32 0.0, %v1023
    %v1025 = vpop.f32.mrf.mxu0
    %1026 = vdwg.mxu0
    %vm1027 = vcmask 64512
    %v1029 = vsel %vm1027, %v161, 0
    %v1032 = vsel %vm1027, %v473, 0
    %1034 = vmatprep.subr.mxu0 0.0
    %1035 = vmatpush1.xpose.msra.mxu0 0.0
    %1036 = vmatprep.subr.mxu0 0.0
    %1037 = vmatpush1.xpose.msra.mxu0 0.0
    %1038 = vmatprep.subr.mxu0 0.0
    %1039 = vmatpush1.xpose.msra.mxu0 0.0
    %1040 = vmatprep.subr.mxu0 0.0
    %1041 = vmatpush1.xpose.msra.mxu0 0.0
    %1042 = vmatprep.subr.mxu0 0.0
    %1043 = vmatpush1.xpose.msra.mxu0 0.0
    %1044 = vmatprep.subr.mxu0 0.0
    %1045 = vmatpush1.xpose.msra.mxu0 0.0
    %1046 = vmatprep.subr.mxu0 0.0
    %1047 = vmatpush1.xpose.msra.mxu0 0.0
    %1048 = vmatprep.subr.mxu0 0.0
    %1049 = vmatpush1.xpose.msra.mxu0 0.0
    %1050 = vmatprep.subr.mxu0 0.0
    %1051 = vmatpush1.xpose.msra.mxu0 0.0
    %1052 = vmatprep.subr.mxu0 0.0
    %1053 = vmatpush1.xpose.msra.mxu0 0.0
    %1054 = vmatprep.subr.mxu0 0.0
    %1055 = vmatpush1.xpose.msra.mxu0 0.0
    %1056 = vmatprep.subr.mxu0 0.0
    %1057 = vmatpush1.xpose.msra.mxu0 0.0
    %1058 = vmatprep.subr.mxu0 0.0
    %1059 = vmatpush1.xpose.msra.mxu0 0.0
    %1060 = vmatprep.subr.mxu0 0.0
    %1061 = vmatpush1.xpose.msra.mxu0 0.0
    %1062 = vmatprep.subr.mxu0 0.0
    %1063 = vmatpush1.xpose.msra.mxu0 0.0
    %1064 = vmatprep.subr.mxu0 0.0
    %1065 = vmatpush1.xpose.msra.mxu0 %v1032
    %1066 = vmatprep.subr.mxu0 0.0
    %1067 = vmatpush2.xpose.msra.mxu0 0.0
    %1068 = vmatprep.subr.mxu0 0.0
    %1069 = vmatpush2.xpose.msra.mxu0 0.0
    %1070 = vmatprep.subr.mxu0 0.0
    %1071 = vmatpush2.xpose.msra.mxu0 0.0
    %1072 = vmatprep.subr.mxu0 0.0
    %1073 = vmatpush2.xpose.msra.mxu0 0.0
    %1074 = vmatprep.subr.mxu0 0.0
    %1075 = vmatpush2.xpose.msra.mxu0 0.0
    %1076 = vmatprep.subr.mxu0 0.0
    %1077 = vmatpush2.xpose.msra.mxu0 0.0
    %1078 = vmatprep.subr.mxu0 0.0
    %1079 = vmatpush2.xpose.msra.mxu0 0.0
    %1080 = vmatprep.subr.mxu0 0.0
    %1081 = vmatpush2.xpose.msra.mxu0 0.0
    %1082 = vmatprep.subr.mxu0 0.0
    %1083 = vmatpush2.xpose.msra.mxu0 0.0
    %1084 = vmatprep.subr.mxu0 0.0
    %1085 = vmatpush2.xpose.msra.mxu0 0.0
    %1086 = vmatprep.subr.mxu0 0.0
    %1087 = vmatpush2.xpose.msra.mxu0 0.0
    %1088 = vmatprep.subr.mxu0 0.0
    %1089 = vmatpush2.xpose.msra.mxu0 0.0
    %1090 = vmatprep.subr.mxu0 0.0
    %1091 = vmatpush2.xpose.msra.mxu0 0.0
    %1092 = vmatprep.subr.mxu0 0.0
    %1093 = vmatpush2.xpose.msra.mxu0 0.0
    %1094 = vmatprep.subr.mxu0 0.0
    %1095 = vmatpush2.xpose.msra.mxu0 0.0
    %1096 = vmatprep.subr.mxu0 0.0
    %1097 = vmatpush2.xpose.msra.mxu0 0.0
    %1098 = vmatprep.mubr.f32.mxu0 0.0
    %1099 = vmatmul.mubr.f32.gmra.mxu0 %v1029
    %v1100 = vpop.f32.mrf.mxu0
    %v1101 = vadd.f32 0.0, %v1100
    %v1102 = vpop.f32.mrf.mxu0
    %1103 = vdwg.mxu0
    %v1105 = vsel %vm1027, %v166, 0
    %v1108 = vsel %vm1027, %v478, 0
    %1110 = vmatprep.subr.mxu0 0.0
    %1111 = vmatpush1.xpose.msra.mxu0 0.0
    %1112 = vmatprep.subr.mxu0 0.0
    %1113 = vmatpush1.xpose.msra.mxu0 0.0
    %1114 = vmatprep.subr.mxu0 0.0
    %1115 = vmatpush1.xpose.msra.mxu0 0.0
    %1116 = vmatprep.subr.mxu0 0.0
    %1117 = vmatpush1.xpose.msra.mxu0 0.0
    %1118 = vmatprep.subr.mxu0 0.0
    %1119 = vmatpush1.xpose.msra.mxu0 0.0
    %1120 = vmatprep.subr.mxu0 0.0
    %1121 = vmatpush1.xpose.msra.mxu0 0.0
    %1122 = vmatprep.subr.mxu0 0.0
    %1123 = vmatpush1.xpose.msra.mxu0 0.0
    %1124 = vmatprep.subr.mxu0 0.0
    %1125 = vmatpush1.xpose.msra.mxu0 0.0
    %1126 = vmatprep.subr.mxu0 0.0
    %1127 = vmatpush1.xpose.msra.mxu0 0.0
    %1128 = vmatprep.subr.mxu0 0.0
    %1129 = vmatpush1.xpose.msra.mxu0 0.0
    %1130 = vmatprep.subr.mxu0 0.0
    %1131 = vmatpush1.xpose.msra.mxu0 0.0
    %1132 = vmatprep.subr.mxu0 0.0
    %1133 = vmatpush1.xpose.msra.mxu0 0.0
    %1134 = vmatprep.subr.mxu0 0.0
    %1135 = vmatpush1.xpose.msra.mxu0 0.0
    %1136 = vmatprep.subr.mxu0 0.0
    %1137 = vmatpush1.xpose.msra.mxu0 0.0
    %1138 = vmatprep.subr.mxu0 0.0
    %1139 = vmatpush1.xpose.msra.mxu0 0.0
    %1140 = vmatprep.subr.mxu0 0.0
    %1141 = vmatpush1.xpose.msra.mxu0 %v1108
    %1142 = vmatprep.subr.mxu0 0.0
    %1143 = vmatpush2.xpose.msra.mxu0 0.0
    %1144 = vmatprep.subr.mxu0 0.0
    %1145 = vmatpush2.xpose.msra.mxu0 0.0
    %1146 = vmatprep.subr.mxu0 0.0
    %1147 = vmatpush2.xpose.msra.mxu0 0.0
    %1148 = vmatprep.subr.mxu0 0.0
    %1149 = vmatpush2.xpose.msra.mxu0 0.0
    %1150 = vmatprep.subr.mxu0 0.0
    %1151 = vmatpush2.xpose.msra.mxu0 0.0
    %1152 = vmatprep.subr.mxu0 0.0
    %1153 = vmatpush2.xpose.msra.mxu0 0.0
    %1154 = vmatprep.subr.mxu0 0.0
    %1155 = vmatpush2.xpose.msra.mxu0 0.0
    %1156 = vmatprep.subr.mxu0 0.0
    %1157 = vmatpush2.xpose.msra.mxu0 0.0
    %1158 = vmatprep.subr.mxu0 0.0
    %1159 = vmatpush2.xpose.msra.mxu0 0.0
    %1160 = vmatprep.subr.mxu0 0.0
    %1161 = vmatpush2.xpose.msra.mxu0 0.0
    %1162 = vmatprep.subr.mxu0 0.0
    %1163 = vmatpush2.xpose.msra.mxu0 0.0
    %1164 = vmatprep.subr.mxu0 0.0
    %1165 = vmatpush2.xpose.msra.mxu0 0.0
    %1166 = vmatprep.subr.mxu0 0.0
    %1167 = vmatpush2.xpose.msra.mxu0 0.0
    %1168 = vmatprep.subr.mxu0 0.0
    %1169 = vmatpush2.xpose.msra.mxu0 0.0
    %1170 = vmatprep.subr.mxu0 0.0
    %1171 = vmatpush2.xpose.msra.mxu0 0.0
    %1172 = vmatprep.subr.mxu0 0.0
    %1173 = vmatpush2.xpose.msra.mxu0 0.0
    %1174 = vmatprep.mubr.f32.mxu0 0.0
    %1175 = vmatmul.mubr.f32.gmra.mxu0 %v1105
    %v1176 = vpop.f32.mrf.mxu0
    %v1177 = vadd.f32 0.0, %v1176
    %v1178 = vpop.f32.mrf.mxu0
    %1179 = vdwg.mxu0
    %v1181 = vsel %vm1027, %v239, 0
    %v1184 = vsel %vm1027, %v551, 0
    %1186 = vmatprep.subr.mxu0 0.0
    %1187 = vmatpush1.xpose.msra.mxu0 0.0
    %1188 = vmatprep.subr.mxu0 0.0
    %1189 = vmatpush1.xpose.msra.mxu0 0.0
    %1190 = vmatprep.subr.mxu0 0.0
    %1191 = vmatpush1.xpose.msra.mxu0 0.0
    %1192 = vmatprep.subr.mxu0 0.0
    %1193 = vmatpush1.xpose.msra.mxu0 0.0
    %1194 = vmatprep.subr.mxu0 0.0
    %1195 = vmatpush1.xpose.msra.mxu0 0.0
    %1196 = vmatprep.subr.mxu0 0.0
    %1197 = vmatpush1.xpose.msra.mxu0 0.0
    %1198 = vmatprep.subr.mxu0 0.0
    %1199 = vmatpush1.xpose.msra.mxu0 0.0
    %1200 = vmatprep.subr.mxu0 0.0
    %1201 = vmatpush1.xpose.msra.mxu0 0.0
    %1202 = vmatprep.subr.mxu0 0.0
    %1203 = vmatpush1.xpose.msra.mxu0 0.0
    %1204 = vmatprep.subr.mxu0 0.0
    %1205 = vmatpush1.xpose.msra.mxu0 0.0
    %1206 = vmatprep.subr.mxu0 0.0
    %1207 = vmatpush1.xpose.msra.mxu0 0.0
    %1208 = vmatprep.subr.mxu0 0.0
    %1209 = vmatpush1.xpose.msra.mxu0 0.0
    %1210 = vmatprep.subr.mxu0 0.0
    %1211 = vmatpush1.xpose.msra.mxu0 0.0
    %1212 = vmatprep.subr.mxu0 0.0
    %1213 = vmatpush1.xpose.msra.mxu0 0.0
    %1214 = vmatprep.subr.mxu0 0.0
    %1215 = vmatpush1.xpose.msra.mxu0 0.0
    %1216 = vmatprep.subr.mxu0 0.0
    %1217 = vmatpush1.xpose.msra.mxu0 %v1184
    %1218 = vmatprep.subr.mxu0 0.0
    %1219 = vmatpush2.xpose.msra.mxu0 0.0
    %1220 = vmatprep.subr.mxu0 0.0
    %1221 = vmatpush2.xpose.msra.mxu0 0.0
    %1222 = vmatprep.subr.mxu0 0.0
    %1223 = vmatpush2.xpose.msra.mxu0 0.0
    %1224 = vmatprep.subr.mxu0 0.0
    %1225 = vmatpush2.xpose.msra.mxu0 0.0
    %1226 = vmatprep.subr.mxu0 0.0
    %1227 = vmatpush2.xpose.msra.mxu0 0.0
    %1228 = vmatprep.subr.mxu0 0.0
    %1229 = vmatpush2.xpose.msra.mxu0 0.0
    %1230 = vmatprep.subr.mxu0 0.0
    %1231 = vmatpush2.xpose.msra.mxu0 0.0
    %1232 = vmatprep.subr.mxu0 0.0
    %1233 = vmatpush2.xpose.msra.mxu0 0.0
    %1234 = vmatprep.subr.mxu0 0.0
    %1235 = vmatpush2.xpose.msra.mxu0 0.0
    %1236 = vmatprep.subr.mxu0 0.0
    %1237 = vmatpush2.xpose.msra.mxu0 0.0
    %1238 = vmatprep.subr.mxu0 0.0
    %1239 = vmatpush2.xpose.msra.mxu0 0.0
    %1240 = vmatprep.subr.mxu0 0.0
    %1241 = vmatpush2.xpose.msra.mxu0 0.0
    %1242 = vmatprep.subr.mxu0 0.0
    %1243 = vmatpush2.xpose.msra.mxu0 0.0
    %1244 = vmatprep.subr.mxu0 0.0
    %1245 = vmatpush2.xpose.msra.mxu0 0.0
    %1246 = vmatprep.subr.mxu0 0.0
    %1247 = vmatpush2.xpose.msra.mxu0 0.0
    %1248 = vmatprep.subr.mxu0 0.0
    %1249 = vmatpush2.xpose.msra.mxu0 0.0
    %1250 = vmatprep.mubr.f32.mxu0 0.0
    %1251 = vmatmul.mubr.f32.gmra.mxu0 %v1181
    %v1252 = vpop.f32.mrf.mxu0
    %v1253 = vadd.f32 0.0, %v1252
    %v1254 = vpop.f32.mrf.mxu0
    %1255 = vdwg.mxu0
    %v1257 = vsel %vm1027, %v244, 0
    %v1260 = vsel %vm1027, %v556, 0
    %1262 = vmatprep.subr.mxu0 0.0
    %1263 = vmatpush1.xpose.msra.mxu0 0.0
    %1264 = vmatprep.subr.mxu0 0.0
    %1265 = vmatpush1.xpose.msra.mxu0 0.0
    %1266 = vmatprep.subr.mxu0 0.0
    %1267 = vmatpush1.xpose.msra.mxu0 0.0
    %1268 = vmatprep.subr.mxu0 0.0
    %1269 = vmatpush1.xpose.msra.mxu0 0.0
    %1270 = vmatprep.subr.mxu0 0.0
    %1271 = vmatpush1.xpose.msra.mxu0 0.0
    %1272 = vmatprep.subr.mxu0 0.0
    %1273 = vmatpush1.xpose.msra.mxu0 0.0
    %1274 = vmatprep.subr.mxu0 0.0
    %1275 = vmatpush1.xpose.msra.mxu0 0.0
    %1276 = vmatprep.subr.mxu0 0.0
    %1277 = vmatpush1.xpose.msra.mxu0 0.0
    %1278 = vmatprep.subr.mxu0 0.0
    %1279 = vmatpush1.xpose.msra.mxu0 0.0
    %1280 = vmatprep.subr.mxu0 0.0
    %1281 = vmatpush1.xpose.msra.mxu0 0.0
    %1282 = vmatprep.subr.mxu0 0.0
    %1283 = vmatpush1.xpose.msra.mxu0 0.0
    %1284 = vmatprep.subr.mxu0 0.0
    %1285 = vmatpush1.xpose.msra.mxu0 0.0
    %1286 = vmatprep.subr.mxu0 0.0
    %1287 = vmatpush1.xpose.msra.mxu0 0.0
    %1288 = vmatprep.subr.mxu0 0.0
    %1289 = vmatpush1.xpose.msra.mxu0 0.0
    %1290 = vmatprep.subr.mxu0 0.0
    %1291 = vmatpush1.xpose.msra.mxu0 0.0
    %1292 = vmatprep.subr.mxu0 0.0
    %1293 = vmatpush1.xpose.msra.mxu0 %v1260
    %1294 = vmatprep.subr.mxu0 0.0
    %1295 = vmatpush2.xpose.msra.mxu0 0.0
    %1296 = vmatprep.subr.mxu0 0.0
    %1297 = vmatpush2.xpose.msra.mxu0 0.0
    %1298 = vmatprep.subr.mxu0 0.0
    %1299 = vmatpush2.xpose.msra.mxu0 0.0
    %1300 = vmatprep.subr.mxu0 0.0
    %1301 = vmatpush2.xpose.msra.mxu0 0.0
    %1302 = vmatprep.subr.mxu0 0.0
    %1303 = vmatpush2.xpose.msra.mxu0 0.0
    %1304 = vmatprep.subr.mxu0 0.0
    %1305 = vmatpush2.xpose.msra.mxu0 0.0
    %1306 = vmatprep.subr.mxu0 0.0
    %1307 = vmatpush2.xpose.msra.mxu0 0.0
    %1308 = vmatprep.subr.mxu0 0.0
    %1309 = vmatpush2.xpose.msra.mxu0 0.0
    %1310 = vmatprep.subr.mxu0 0.0
    %1311 = vmatpush2.xpose.msra.mxu0 0.0
    %1312 = vmatprep.subr.mxu0 0.0
    %1313 = vmatpush2.xpose.msra.mxu0 0.0
    %1314 = vmatprep.subr.mxu0 0.0
    %1315 = vmatpush2.xpose.msra.mxu0 0.0
    %1316 = vmatprep.subr.mxu0 0.0
    %1317 = vmatpush2.xpose.msra.mxu0 0.0
    %1318 = vmatprep.subr.mxu0 0.0
    %1319 = vmatpush2.xpose.msra.mxu0 0.0
    %1320 = vmatprep.subr.mxu0 0.0
    %1321 = vmatpush2.xpose.msra.mxu0 0.0
    %1322 = vmatprep.subr.mxu0 0.0
    %1323 = vmatpush2.xpose.msra.mxu0 0.0
    %1324 = vmatprep.subr.mxu0 0.0
    %1325 = vmatpush2.xpose.msra.mxu0 0.0
    %1326 = vmatprep.mubr.f32.mxu0 0.0
    %1327 = vmatmul.mubr.f32.gmra.mxu0 %v1257
    %v1328 = vpop.f32.mrf.mxu0
    %v1329 = vadd.f32 0.0, %v1328
    %v1330 = vpop.f32.mrf.mxu0
    %1331 = vdwg.mxu0
    %v1333 = vsel %vm1027, %v317, 0
    %v1336 = vsel %vm1027, %v629, 0
    %1338 = vmatprep.subr.mxu0 0.0
    %1339 = vmatpush1.xpose.msra.mxu0 0.0
    %1340 = vmatprep.subr.mxu0 0.0
    %1341 = vmatpush1.xpose.msra.mxu0 0.0
    %1342 = vmatprep.subr.mxu0 0.0
    %1343 = vmatpush1.xpose.msra.mxu0 0.0
    %1344 = vmatprep.subr.mxu0 0.0
    %1345 = vmatpush1.xpose.msra.mxu0 0.0
    %1346 = vmatprep.subr.mxu0 0.0
    %1347 = vmatpush1.xpose.msra.mxu0 0.0
    %1348 = vmatprep.subr.mxu0 0.0
    %1349 = vmatpush1.xpose.msra.mxu0 0.0
    %1350 = vmatprep.subr.mxu0 0.0
    %1351 = vmatpush1.xpose.msra.mxu0 0.0
    %1352 = vmatprep.subr.mxu0 0.0
    %1353 = vmatpush1.xpose.msra.mxu0 0.0
    %1354 = vmatprep.subr.mxu0 0.0
    %1355 = vmatpush1.xpose.msra.mxu0 0.0
    %1356 = vmatprep.subr.mxu0 0.0
    %1357 = vmatpush1.xpose.msra.mxu0 0.0
    %1358 = vmatprep.subr.mxu0 0.0
    %1359 = vmatpush1.xpose.msra.mxu0 0.0
    %1360 = vmatprep.subr.mxu0 0.0
    %1361 = vmatpush1.xpose.msra.mxu0 0.0
    %1362 = vmatprep.subr.mxu0 0.0
    %1363 = vmatpush1.xpose.msra.mxu0 0.0
    %1364 = vmatprep.subr.mxu0 0.0
    %1365 = vmatpush1.xpose.msra.mxu0 0.0
    %1366 = vmatprep.subr.mxu0 0.0
    %1367 = vmatpush1.xpose.msra.mxu0 0.0
    %1368 = vmatprep.subr.mxu0 0.0
    %1369 = vmatpush1.xpose.msra.mxu0 %v1336
    %1370 = vmatprep.subr.mxu0 0.0
    %1371 = vmatpush2.xpose.msra.mxu0 0.0
    %1372 = vmatprep.subr.mxu0 0.0
    %1373 = vmatpush2.xpose.msra.mxu0 0.0
    %1374 = vmatprep.subr.mxu0 0.0
    %1375 = vmatpush2.xpose.msra.mxu0 0.0
    %1376 = vmatprep.subr.mxu0 0.0
    %1377 = vmatpush2.xpose.msra.mxu0 0.0
    %1378 = vmatprep.subr.mxu0 0.0
    %1379 = vmatpush2.xpose.msra.mxu0 0.0
    %1380 = vmatprep.subr.mxu0 0.0
    %1381 = vmatpush2.xpose.msra.mxu0 0.0
    %1382 = vmatprep.subr.mxu0 0.0
    %1383 = vmatpush2.xpose.msra.mxu0 0.0
    %1384 = vmatprep.subr.mxu0 0.0
    %1385 = vmatpush2.xpose.msra.mxu0 0.0
    %1386 = vmatprep.subr.mxu0 0.0
    %1387 = vmatpush2.xpose.msra.mxu0 0.0
    %1388 = vmatprep.subr.mxu0 0.0
    %1389 = vmatpush2.xpose.msra.mxu0 0.0
    %1390 = vmatprep.subr.mxu0 0.0
    %1391 = vmatpush2.xpose.msra.mxu0 0.0
    %1392 = vmatprep.subr.mxu0 0.0
    %1393 = vmatpush2.xpose.msra.mxu0 0.0
    %1394 = vmatprep.subr.mxu0 0.0
    %1395 = vmatpush2.xpose.msra.mxu0 0.0
    %1396 = vmatprep.subr.mxu0 0.0
    %1397 = vmatpush2.xpose.msra.mxu0 0.0
    %1398 = vmatprep.subr.mxu0 0.0
    %1399 = vmatpush2.xpose.msra.mxu0 0.0
    %1400 = vmatprep.subr.mxu0 0.0
    %1401 = vmatpush2.xpose.msra.mxu0 0.0
    %1402 = vmatprep.mubr.f32.mxu0 0.0
    %1403 = vmatmul.mubr.f32.gmra.mxu0 %v1333
    %v1404 = vpop.f32.mrf.mxu0
    %v1405 = vadd.f32 0.0, %v1404
    %v1406 = vpop.f32.mrf.mxu0
    %1407 = vdwg.mxu0
    %v1409 = vsel %vm1027, %v322, 0
    %v1412 = vsel %vm1027, %v634, 0
    %1414 = vmatprep.subr.mxu0 0.0
    %1415 = vmatpush1.xpose.msra.mxu0 0.0
    %1416 = vmatprep.subr.mxu0 0.0
    %1417 = vmatpush1.xpose.msra.mxu0 0.0
    %1418 = vmatprep.subr.mxu0 0.0
    %1419 = vmatpush1.xpose.msra.mxu0 0.0
    %1420 = vmatprep.subr.mxu0 0.0
    %1421 = vmatpush1.xpose.msra.mxu0 0.0
    %1422 = vmatprep.subr.mxu0 0.0
    %1423 = vmatpush1.xpose.msra.mxu0 0.0
    %1424 = vmatprep.subr.mxu0 0.0
    %1425 = vmatpush1.xpose.msra.mxu0 0.0
    %1426 = vmatprep.subr.mxu0 0.0
    %1427 = vmatpush1.xpose.msra.mxu0 0.0
    %1428 = vmatprep.subr.mxu0 0.0
    %1429 = vmatpush1.xpose.msra.mxu0 0.0
    %1430 = vmatprep.subr.mxu0 0.0
    %1431 = vmatpush1.xpose.msra.mxu0 0.0
    %1432 = vmatprep.subr.mxu0 0.0
    %1433 = vmatpush1.xpose.msra.mxu0 0.0
    %1434 = vmatprep.subr.mxu0 0.0
    %1435 = vmatpush1.xpose.msra.mxu0 0.0
    %1436 = vmatprep.subr.mxu0 0.0
    %1437 = vmatpush1.xpose.msra.mxu0 0.0
    %1438 = vmatprep.subr.mxu0 0.0
    %1439 = vmatpush1.xpose.msra.mxu0 0.0
    %1440 = vmatprep.subr.mxu0 0.0
    %1441 = vmatpush1.xpose.msra.mxu0 0.0
    %1442 = vmatprep.subr.mxu0 0.0
    %1443 = vmatpush1.xpose.msra.mxu0 0.0
    %1444 = vmatprep.subr.mxu0 0.0
    %1445 = vmatpush1.xpose.msra.mxu0 %v1412
    %1446 = vmatprep.subr.mxu0 0.0
    %1447 = vmatpush2.xpose.msra.mxu0 0.0
    %1448 = vmatprep.subr.mxu0 0.0
    %1449 = vmatpush2.xpose.msra.mxu0 0.0
    %1450 = vmatprep.subr.mxu0 0.0
    %1451 = vmatpush2.xpose.msra.mxu0 0.0
    %1452 = vmatprep.subr.mxu0 0.0
    %1453 = vmatpush2.xpose.msra.mxu0 0.0
    %1454 = vmatprep.subr.mxu0 0.0
    %1455 = vmatpush2.xpose.msra.mxu0 0.0
    %1456 = vmatprep.subr.mxu0 0.0
    %1457 = vmatpush2.xpose.msra.mxu0 0.0
    %1458 = vmatprep.subr.mxu0 0.0
    %1459 = vmatpush2.xpose.msra.mxu0 0.0
    %1460 = vmatprep.subr.mxu0 0.0
    %1461 = vmatpush2.xpose.msra.mxu0 0.0
    %1462 = vmatprep.subr.mxu0 0.0
    %1463 = vmatpush2.xpose.msra.mxu0 0.0
    %1464 = vmatprep.subr.mxu0 0.0
    %1465 = vmatpush2.xpose.msra.mxu0 0.0
    %1466 = vmatprep.subr.mxu0 0.0
    %1467 = vmatpush2.xpose.msra.mxu0 0.0
    %1468 = vmatprep.subr.mxu0 0.0
    %1469 = vmatpush2.xpose.msra.mxu0 0.0
    %1470 = vmatprep.subr.mxu0 0.0
    %1471 = vmatpush2.xpose.msra.mxu0 0.0
    %1472 = vmatprep.subr.mxu0 0.0
    %1473 = vmatpush2.xpose.msra.mxu0 0.0
    %1474 = vmatprep.subr.mxu0 0.0
    %1475 = vmatpush2.xpose.msra.mxu0 0.0
    %1476 = vmatprep.subr.mxu0 0.0
    %1477 = vmatpush2.xpose.msra.mxu0 0.0
    %1478 = vmatprep.mubr.f32.mxu0 0.0
    %1479 = vmatmul.mubr.f32.gmra.mxu0 %v1409
    %v1480 = vpop.f32.mrf.mxu0
    %v1481 = vadd.f32 0.0, %v1480
    %v1482 = vpop.f32.mrf.mxu0
    %1483 = vdwg.mxu0
    %v1485 = vsel %vm1027, %v395, 0
    %v1488 = vsel %vm1027, %v707, 0
    %1490 = vmatprep.subr.mxu0 0.0
    %1491 = vmatpush1.xpose.msra.mxu0 0.0
    %1492 = vmatprep.subr.mxu0 0.0
    %1493 = vmatpush1.xpose.msra.mxu0 0.0
    %1494 = vmatprep.subr.mxu0 0.0
    %1495 = vmatpush1.xpose.msra.mxu0 0.0
    %1496 = vmatprep.subr.mxu0 0.0
    %1497 = vmatpush1.xpose.msra.mxu0 0.0
    %1498 = vmatprep.subr.mxu0 0.0
    %1499 = vmatpush1.xpose.msra.mxu0 0.0
    %1500 = vmatprep.subr.mxu0 0.0
    %1501 = vmatpush1.xpose.msra.mxu0 0.0
    %1502 = vmatprep.subr.mxu0 0.0
    %1503 = vmatpush1.xpose.msra.mxu0 0.0
    %1504 = vmatprep.subr.mxu0 0.0
    %1505 = vmatpush1.xpose.msra.mxu0 0.0
    %1506 = vmatprep.subr.mxu0 0.0
    %1507 = vmatpush1.xpose.msra.mxu0 0.0
    %1508 = vmatprep.subr.mxu0 0.0
    %1509 = vmatpush1.xpose.msra.mxu0 0.0
    %1510 = vmatprep.subr.mxu0 0.0
    %1511 = vmatpush1.xpose.msra.mxu0 0.0
    %1512 = vmatprep.subr.mxu0 0.0
    %1513 = vmatpush1.xpose.msra.mxu0 0.0
    %1514 = vmatprep.subr.mxu0 0.0
    %1515 = vmatpush1.xpose.msra.mxu0 0.0
    %1516 = vmatprep.subr.mxu0 0.0
    %1517 = vmatpush1.xpose.msra.mxu0 0.0
    %1518 = vmatprep.subr.mxu0 0.0
    %1519 = vmatpush1.xpose.msra.mxu0 0.0
    %1520 = vmatprep.subr.mxu0 0.0
    %1521 = vmatpush1.xpose.msra.mxu0 %v1488
    %1522 = vmatprep.subr.mxu0 0.0
    %1523 = vmatpush2.xpose.msra.mxu0 0.0
    %1524 = vmatprep.subr.mxu0 0.0
    %1525 = vmatpush2.xpose.msra.mxu0 0.0
    %1526 = vmatprep.subr.mxu0 0.0
    %1527 = vmatpush2.xpose.msra.mxu0 0.0
    %1528 = vmatprep.subr.mxu0 0.0
    %1529 = vmatpush2.xpose.msra.mxu0 0.0
    %1530 = vmatprep.subr.mxu0 0.0
    %1531 = vmatpush2.xpose.msra.mxu0 0.0
    %1532 = vmatprep.subr.mxu0 0.0
    %1533 = vmatpush2.xpose.msra.mxu0 0.0
    %1534 = vmatprep.subr.mxu0 0.0
    %1535 = vmatpush2.xpose.msra.mxu0 0.0
    %1536 = vmatprep.subr.mxu0 0.0
    %1537 = vmatpush2.xpose.msra.mxu0 0.0
    %1538 = vmatprep.subr.mxu0 0.0
    %1539 = vmatpush2.xpose.msra.mxu0 0.0
    %1540 = vmatprep.subr.mxu0 0.0
    %1541 = vmatpush2.xpose.msra.mxu0 0.0
    %1542 = vmatprep.subr.mxu0 0.0
    %1543 = vmatpush2.xpose.msra.mxu0 0.0
    %1544 = vmatprep.subr.mxu0 0.0
    %1545 = vmatpush2.xpose.msra.mxu0 0.0
    %1546 = vmatprep.subr.mxu0 0.0
    %1547 = vmatpush2.xpose.msra.mxu0 0.0
    %1548 = vmatprep.subr.mxu0 0.0
    %1549 = vmatpush2.xpose.msra.mxu0 0.0
    %1550 = vmatprep.subr.mxu0 0.0
    %1551 = vmatpush2.xpose.msra.mxu0 0.0
    %1552 = vmatprep.subr.mxu0 0.0
    %1553 = vmatpush2.xpose.msra.mxu0 0.0
    %1554 = vmatprep.mubr.f32.mxu0 0.0
    %1555 = vmatmul.mubr.f32.gmra.mxu0 %v1485
    %v1556 = vpop.f32.mrf.mxu0
    %v1557 = vadd.f32 0.0, %v1556
    %v1558 = vpop.f32.mrf.mxu0
    %1559 = vdwg.mxu0
    %v1561 = vsel %vm1027, %v400, 0
    %v1564 = vsel %vm1027, %v712, 0
    %1566 = vmatprep.subr.mxu0 0.0
    %1567 = vmatpush1.xpose.msra.mxu0 0.0
    %1568 = vmatprep.subr.mxu0 0.0
    %1569 = vmatpush1.xpose.msra.mxu0 0.0
    %1570 = vmatprep.subr.mxu0 0.0
    %1571 = vmatpush1.xpose.msra.mxu0 0.0
    %1572 = vmatprep.subr.mxu0 0.0
    %1573 = vmatpush1.xpose.msra.mxu0 0.0
    %1574 = vmatprep.subr.mxu0 0.0
    %1575 = vmatpush1.xpose.msra.mxu0 0.0
    %1576 = vmatprep.subr.mxu0 0.0
    %1577 = vmatpush1.xpose.msra.mxu0 0.0
    %1578 = vmatprep.subr.mxu0 0.0
    %1579 = vmatpush1.xpose.msra.mxu0 0.0
    %1580 = vmatprep.subr.mxu0 0.0
    %1581 = vmatpush1.xpose.msra.mxu0 0.0
    %1582 = vmatprep.subr.mxu0 0.0
    %1583 = vmatpush1.xpose.msra.mxu0 0.0
    %1584 = vmatprep.subr.mxu0 0.0
    %1585 = vmatpush1.xpose.msra.mxu0 0.0
    %1586 = vmatprep.subr.mxu0 0.0
    %1587 = vmatpush1.xpose.msra.mxu0 0.0
    %1588 = vmatprep.subr.mxu0 0.0
    %1589 = vmatpush1.xpose.msra.mxu0 0.0
    %1590 = vmatprep.subr.mxu0 0.0
    %1591 = vmatpush1.xpose.msra.mxu0 0.0
    %1592 = vmatprep.subr.mxu0 0.0
    %1593 = vmatpush1.xpose.msra.mxu0 0.0
    %1594 = vmatprep.subr.mxu0 0.0
    %1595 = vmatpush1.xpose.msra.mxu0 0.0
    %1596 = vmatprep.subr.mxu0 0.0
    %1597 = vmatpush1.xpose.msra.mxu0 %v1564
    %1598 = vmatprep.subr.mxu0 0.0
    %1599 = vmatpush2.xpose.msra.mxu0 0.0
    %1600 = vmatprep.subr.mxu0 0.0
    %1601 = vmatpush2.xpose.msra.mxu0 0.0
    %1602 = vmatprep.subr.mxu0 0.0
    %1603 = vmatpush2.xpose.msra.mxu0 0.0
    %1604 = vmatprep.subr.mxu0 0.0
    %1605 = vmatpush2.xpose.msra.mxu0 0.0
    %1606 = vmatprep.subr.mxu0 0.0
    %1607 = vmatpush2.xpose.msra.mxu0 0.0
    %1608 = vmatprep.subr.mxu0 0.0
    %1609 = vmatpush2.xpose.msra.mxu0 0.0
    %1610 = vmatprep.subr.mxu0 0.0
    %1611 = vmatpush2.xpose.msra.mxu0 0.0
    %1612 = vmatprep.subr.mxu0 0.0
    %1613 = vmatpush2.xpose.msra.mxu0 0.0
    %1614 = vmatprep.subr.mxu0 0.0
    %1615 = vmatpush2.xpose.msra.mxu0 0.0
    %1616 = vmatprep.subr.mxu0 0.0
    %1617 = vmatpush2.xpose.msra.mxu0 0.0
    %1618 = vmatprep.subr.mxu0 0.0
    %1619 = vmatpush2.xpose.msra.mxu0 0.0
    %1620 = vmatprep.subr.mxu0 0.0
    %1621 = vmatpush2.xpose.msra.mxu0 0.0
    %1622 = vmatprep.subr.mxu0 0.0
    %1623 = vmatpush2.xpose.msra.mxu0 0.0
    %1624 = vmatprep.subr.mxu0 0.0
    %1625 = vmatpush2.xpose.msra.mxu0 0.0
    %1626 = vmatprep.subr.mxu0 0.0
    %1627 = vmatpush2.xpose.msra.mxu0 0.0
    %1628 = vmatprep.subr.mxu0 0.0
    %1629 = vmatpush2.xpose.msra.mxu0 0.0
    %1630 = vmatprep.mubr.f32.mxu0 0.0
    %1631 = vmatmul.mubr.f32.gmra.mxu0 %v1561
    %v1632 = vpop.f32.mrf.mxu0
    %v1633 = vadd.f32 0.0, %v1632
    %v1634 = vpop.f32.mrf.mxu0
    %1635 = vdwg.mxu0
    %v1636 = vld [vmem:[%s4] sm:$0xff]
    %v1637 = vld [vmem:[%s4 + $0x8] sm:$0xff]
    %v1638 = vld [vmem:[%s4 + $0x10] sm:$0xff]
    %v1639 = vld [vmem:[%s4 + $0x18] sm:$0xff]
    %v1640 = vld [vmem:[%s4 + $0x20] sm:$0xff]
    %v1641 = vld [vmem:[%s4 + $0x28] sm:$0xff]
    %v1642 = vld [vmem:[%s4 + $0x30] sm:$0xff]
    %v1643 = vld [vmem:[%s4 + $0x38] sm:$0xff]
    %v1644 = vmul.f32 %v1101, %v1636
    %v1645 = vmul.f32 %v1177, %v1637
    %v1646 = vmul.f32 %v1253, %v1638
    %v1647 = vmul.f32 %v1329, %v1639
    %v1648 = vmul.f32 %v1405, %v1640
    %v1649 = vmul.f32 %v1481, %v1641
    %v1650 = vmul.f32 %v1557, %v1642
    %v1651 = vmul.f32 %v1633, %v1643
    %v1652 = vsel %vm1027, %v1644, -inf
    %1653 = vmax.xlane.f32.xlu0 %v1652
    %v1654 = vpop.xlane.xlu0 %1653
    %v1655 = vsel %vm1027, %v1645, -inf
    %1656 = vmax.xlane.f32.xlu0 %v1655
    %v1657 = vpop.xlane.xlu0 %1656
    %v1658 = vsel %vm1027, %v1646, -inf
    %1659 = vmax.xlane.f32.xlu0 %v1658
    %v1660 = vpop.xlane.xlu0 %1659
    %v1661 = vsel %vm1027, %v1647, -inf
    %1662 = vmax.xlane.f32.xlu0 %v1661
    %v1663 = vpop.xlane.xlu0 %1662
    %v1664 = vsel %vm1027, %v1648, -inf
    %1665 = vmax.xlane.f32.xlu0 %v1664
    %v1666 = vpop.xlane.xlu0 %1665
    %v1667 = vsel %vm1027, %v1649, -inf
    %1668 = vmax.xlane.f32.xlu0 %v1667
    %v1669 = vpop.xlane.xlu0 %1668
    %v1670 = vsel %vm1027, %v1650, -inf
    %1671 = vmax.xlane.f32.xlu0 %v1670
    %v1672 = vpop.xlane.xlu0 %1671
    %v1673 = vsel %vm1027, %v1651, -inf
    %1674 = vmax.xlane.f32.xlu0 %v1673
    %v1675 = vpop.xlane.xlu0 %1674
    %v1676 = vsub.f32 %v1644, %v1654
    %v1677 = vsub.f32 %v1645, %v1657
    %v1678 = vsub.f32 %v1646, %v1660
    %v1679 = vsub.f32 %v1647, %v1663
    %v1680 = vsub.f32 %v1648, %v1666
    %v1681 = vsub.f32 %v1649, %v1669
    %v1682 = vsub.f32 %v1650, %v1672
    %v1683 = vsub.f32 %v1651, %v1675
    %v1684 = vmul.f32 %v1676, 1.442695
    %v1685 = vpow.pop %v1684
    %v1686 = vmul.f32 %v1677, 1.442695
    %v1687 = vpow.pop %v1686
    %v1688 = vmul.f32 %v1678, 1.442695
    %v1689 = vpow.pop %v1688
    %v1690 = vmul.f32 %v1679, 1.442695
    %v1691 = vpow.pop %v1690
    %v1692 = vmul.f32 %v1680, 1.442695
    %v1693 = vpow.pop %v1692
    %v1694 = vmul.f32 %v1681, 1.442695
    %v1695 = vpow.pop %v1694
    %v1696 = vmul.f32 %v1682, 1.442695
    %v1697 = vpow.pop %v1696
    %v1698 = vmul.f32 %v1683, 1.442695
    %v1699 = vpow.pop %v1698
    %v1700 = vsel %vm1027, %v1685, 0.0
    %1701 = vadd.xlane.f32.xlu0 %v1700
    %v1702 = vpop.xlane.xlu0 %1701
    %v1703 = vsel %vm1027, %v1687, 0.0
    %1704 = vadd.xlane.f32.xlu0 %v1703
    %v1705 = vpop.xlane.xlu0 %1704
    %v1706 = vsel %vm1027, %v1689, 0.0
    %1707 = vadd.xlane.f32.xlu0 %v1706
    %v1708 = vpop.xlane.xlu0 %1707
    %v1709 = vsel %vm1027, %v1691, 0.0
    %1710 = vadd.xlane.f32.xlu0 %v1709
    %v1711 = vpop.xlane.xlu0 %1710
    %v1712 = vsel %vm1027, %v1693, 0.0
    %1713 = vadd.xlane.f32.xlu0 %v1712
    %v1714 = vpop.xlane.xlu0 %1713
    %v1715 = vsel %vm1027, %v1695, 0.0
    %1716 = vadd.xlane.f32.xlu0 %v1715
    %v1717 = vpop.xlane.xlu0 %1716
    %v1718 = vsel %vm1027, %v1697, 0.0
    %1719 = vadd.xlane.f32.xlu0 %v1718
    %v1720 = vpop.xlane.xlu0 %1719
    %v1721 = vsel %vm1027, %v1699, 0.0
    %1722 = vadd.xlane.f32.xlu0 %v1721
    %v1723 = vpop.xlane.xlu0 %1722
    %v1724 = vrcp.pop %v1702
    %v1725 = vmul.f32 %v1685, %v1724
    %v1726 = vrcp.pop %v1705
    %v1727 = vmul.f32 %v1687, %v1726
    %v1728 = vrcp.pop %v1708
    %v1729 = vmul.f32 %v1689, %v1728
    %v1730 = vrcp.pop %v1711
    %v1731 = vmul.f32 %v1691, %v1730
    %v1732 = vrcp.pop %v1714
    %v1733 = vmul.f32 %v1693, %v1732
    %v1734 = vrcp.pop %v1717
    %v1735 = vmul.f32 %v1695, %v1734
    %v1736 = vrcp.pop %v1720
    %v1737 = vmul.f32 %v1697, %v1736
    %v1738 = vrcp.pop %v1723
    %v1739 = vmul.f32 %v1699, %v1738
    %v1741 = vsel %vm1027, %v1725, 0
    %1743 = vmatprep.subr.mxu0 0.0
    %1744 = vmatpush1.msra.mxu0 0.0
    %1745 = vmatprep.subr.mxu0 0.0
    %1746 = vmatpush1.msra.mxu0 0.0
    %1747 = vmatprep.subr.mxu0 0.0
    %1748 = vmatpush1.msra.mxu0 0.0
    %1749 = vmatprep.subr.mxu0 0.0
    %1750 = vmatpush1.msra.mxu0 0.0
    %1751 = vmatprep.subr.mxu0 0.0
    %1752 = vmatpush1.msra.mxu0 0.0
    %1753 = vmatprep.subr.mxu0 0.0
    %1754 = vmatpush1.msra.mxu0 0.0
    %1755 = vmatprep.subr.mxu0 0.0
    %1756 = vmatpush1.msra.mxu0 0.0
    %1757 = vmatprep.subr.mxu0 0.0
    %1758 = vmatpush1.msra.mxu0 0.0
    %1759 = vmatprep.subr.mxu0 0.0
    %1760 = vmatpush1.msra.mxu0 0.0
    %1761 = vmatprep.subr.mxu0 0.0
    %1762 = vmatpush1.msra.mxu0 0.0
    %1763 = vmatprep.subr.mxu0 0.0
    %1764 = vmatpush1.msra.mxu0 0.0
    %1765 = vmatprep.subr.mxu0 0.0
    %1766 = vmatpush1.msra.mxu0 0.0
    %1767 = vmatprep.subr.mxu0 0.0
    %1768 = vmatpush1.msra.mxu0 0.0
    %1769 = vmatprep.subr.mxu0 0.0
    %1770 = vmatpush1.msra.mxu0 0.0
    %1771 = vmatprep.subr.mxu0 0.0
    %1772 = vmatpush1.msra.mxu0 0.0
    %1773 = vmatprep.subr.mxu0 0.0
    %1774 = vmatpush1.msra.mxu0 %v785
    %1775 = vmatprep.subr.mxu0 0.0
    %1776 = vmatpush2.msra.mxu0 0.0
    %1777 = vmatprep.subr.mxu0 0.0
    %1778 = vmatpush2.msra.mxu0 0.0
    %1779 = vmatprep.subr.mxu0 0.0
    %1780 = vmatpush2.msra.mxu0 0.0
    %1781 = vmatprep.subr.mxu0 0.0
    %1782 = vmatpush2.msra.mxu0 0.0
    %1783 = vmatprep.subr.mxu0 0.0
    %1784 = vmatpush2.msra.mxu0 0.0
    %1785 = vmatprep.subr.mxu0 0.0
    %1786 = vmatpush2.msra.mxu0 0.0
    %1787 = vmatprep.subr.mxu0 0.0
    %1788 = vmatpush2.msra.mxu0 0.0
    %1789 = vmatprep.subr.mxu0 0.0
    %1790 = vmatpush2.msra.mxu0 0.0
    %1791 = vmatprep.subr.mxu0 0.0
    %1792 = vmatpush2.msra.mxu0 0.0
    %1793 = vmatprep.subr.mxu0 0.0
    %1794 = vmatpush2.msra.mxu0 0.0
    %1795 = vmatprep.subr.mxu0 0.0
    %1796 = vmatpush2.msra.mxu0 0.0
    %1797 = vmatprep.subr.mxu0 0.0
    %1798 = vmatpush2.msra.mxu0 0.0
    %1799 = vmatprep.subr.mxu0 0.0
    %1800 = vmatpush2.msra.mxu0 0.0
    %1801 = vmatprep.subr.mxu0 0.0
    %1802 = vmatpush2.msra.mxu0 0.0
    %1803 = vmatprep.subr.mxu0 0.0
    %1804 = vmatpush2.msra.mxu0 0.0
    %1805 = vmatprep.subr.mxu0 0.0
    %1806 = vmatpush2.msra.mxu0 0.0
    %1807 = vmatprep.mubr.f32.mxu0 0.0
    %1808 = vmatmul.mubr.f32.gmra.mxu0 %v1741
    %v1809 = vpop.f32.mrf.mxu0
    %v1810 = vadd.f32 0.0, %v1809
    %v1811 = vpop.f32.mrf.mxu0
    %1812 = vdwg.mxu0
    %v1814 = vsel %vm1027, %v1727, 0
    %1816 = vmatprep.subr.mxu0 0.0
    %1817 = vmatpush1.msra.mxu0 0.0
    %1818 = vmatprep.subr.mxu0 0.0
    %1819 = vmatpush1.msra.mxu0 0.0
    %1820 = vmatprep.subr.mxu0 0.0
    %1821 = vmatpush1.msra.mxu0 0.0
    %1822 = vmatprep.subr.mxu0 0.0
    %1823 = vmatpush1.msra.mxu0 0.0
    %1824 = vmatprep.subr.mxu0 0.0
    %1825 = vmatpush1.msra.mxu0 0.0
    %1826 = vmatprep.subr.mxu0 0.0
    %1827 = vmatpush1.msra.mxu0 0.0
    %1828 = vmatprep.subr.mxu0 0.0
    %1829 = vmatpush1.msra.mxu0 0.0
    %1830 = vmatprep.subr.mxu0 0.0
    %1831 = vmatpush1.msra.mxu0 0.0
    %1832 = vmatprep.subr.mxu0 0.0
    %1833 = vmatpush1.msra.mxu0 0.0
    %1834 = vmatprep.subr.mxu0 0.0
    %1835 = vmatpush1.msra.mxu0 0.0
    %1836 = vmatprep.subr.mxu0 0.0
    %1837 = vmatpush1.msra.mxu0 0.0
    %1838 = vmatprep.subr.mxu0 0.0
    %1839 = vmatpush1.msra.mxu0 0.0
    %1840 = vmatprep.subr.mxu0 0.0
    %1841 = vmatpush1.msra.mxu0 0.0
    %1842 = vmatprep.subr.mxu0 0.0
    %1843 = vmatpush1.msra.mxu0 0.0
    %1844 = vmatprep.subr.mxu0 0.0
    %1845 = vmatpush1.msra.mxu0 0.0
    %1846 = vmatprep.subr.mxu0 0.0
    %1847 = vmatpush1.msra.mxu0 %v790
    %1848 = vmatprep.subr.mxu0 0.0
    %1849 = vmatpush2.msra.mxu0 0.0
    %1850 = vmatprep.subr.mxu0 0.0
    %1851 = vmatpush2.msra.mxu0 0.0
    %1852 = vmatprep.subr.mxu0 0.0
    %1853 = vmatpush2.msra.mxu0 0.0
    %1854 = vmatprep.subr.mxu0 0.0
    %1855 = vmatpush2.msra.mxu0 0.0
    %1856 = vmatprep.subr.mxu0 0.0
    %1857 = vmatpush2.msra.mxu0 0.0
    %1858 = vmatprep.subr.mxu0 0.0
    %1859 = vmatpush2.msra.mxu0 0.0
    %1860 = vmatprep.subr.mxu0 0.0
    %1861 = vmatpush2.msra.mxu0 0.0
    %1862 = vmatprep.subr.mxu0 0.0
    %1863 = vmatpush2.msra.mxu0 0.0
    %1864 = vmatprep.subr.mxu0 0.0
    %1865 = vmatpush2.msra.mxu0 0.0
    %1866 = vmatprep.subr.mxu0 0.0
    %1867 = vmatpush2.msra.mxu0 0.0
    %1868 = vmatprep.subr.mxu0 0.0
    %1869 = vmatpush2.msra.mxu0 0.0
    %1870 = vmatprep.subr.mxu0 0.0
    %1871 = vmatpush2.msra.mxu0 0.0
    %1872 = vmatprep.subr.mxu0 0.0
    %1873 = vmatpush2.msra.mxu0 0.0
    %1874 = vmatprep.subr.mxu0 0.0
    %1875 = vmatpush2.msra.mxu0 0.0
    %1876 = vmatprep.subr.mxu0 0.0
    %1877 = vmatpush2.msra.mxu0 0.0
    %1878 = vmatprep.subr.mxu0 0.0
    %1879 = vmatpush2.msra.mxu0 0.0
    %1880 = vmatprep.mubr.f32.mxu0 0.0
    %1881 = vmatmul.mubr.f32.gmra.mxu0 %v1814
    %v1882 = vpop.f32.mrf.mxu0
    %v1883 = vadd.f32 0.0, %v1882
    %v1884 = vpop.f32.mrf.mxu0
    %1885 = vdwg.mxu0
    %v1887 = vsel %vm1027, %v1729, 0
    %1889 = vmatprep.subr.mxu0 0.0
    %1890 = vmatpush1.msra.mxu0 0.0
    %1891 = vmatprep.subr.mxu0 0.0
    %1892 = vmatpush1.msra.mxu0 0.0
    %1893 = vmatprep.subr.mxu0 0.0
    %1894 = vmatpush1.msra.mxu0 0.0
    %1895 = vmatprep.subr.mxu0 0.0
    %1896 = vmatpush1.msra.mxu0 0.0
    %1897 = vmatprep.subr.mxu0 0.0
    %1898 = vmatpush1.msra.mxu0 0.0
    %1899 = vmatprep.subr.mxu0 0.0
    %1900 = vmatpush1.msra.mxu0 0.0
    %1901 = vmatprep.subr.mxu0 0.0
    %1902 = vmatpush1.msra.mxu0 0.0
    %1903 = vmatprep.subr.mxu0 0.0
    %1904 = vmatpush1.msra.mxu0 0.0
    %1905 = vmatprep.subr.mxu0 0.0
    %1906 = vmatpush1.msra.mxu0 0.0
    %1907 = vmatprep.subr.mxu0 0.0
    %1908 = vmatpush1.msra.mxu0 0.0
    %1909 = vmatprep.subr.mxu0 0.0
    %1910 = vmatpush1.msra.mxu0 0.0
    %1911 = vmatprep.subr.mxu0 0.0
    %1912 = vmatpush1.msra.mxu0 0.0
    %1913 = vmatprep.subr.mxu0 0.0
    %1914 = vmatpush1.msra.mxu0 0.0
    %1915 = vmatprep.subr.mxu0 0.0
    %1916 = vmatpush1.msra.mxu0 0.0
    %1917 = vmatprep.subr.mxu0 0.0
    %1918 = vmatpush1.msra.mxu0 0.0
    %1919 = vmatprep.subr.mxu0 0.0
    %1920 = vmatpush1.msra.mxu0 %v863
    %1921 = vmatprep.subr.mxu0 0.0
    %1922 = vmatpush2.msra.mxu0 0.0
    %1923 = vmatprep.subr.mxu0 0.0
    %1924 = vmatpush2.msra.mxu0 0.0
    %1925 = vmatprep.subr.mxu0 0.0
    %1926 = vmatpush2.msra.mxu0 0.0
    %1927 = vmatprep.subr.mxu0 0.0
    %1928 = vmatpush2.msra.mxu0 0.0
    %1929 = vmatprep.subr.mxu0 0.0
    %1930 = vmatpush2.msra.mxu0 0.0
    %1931 = vmatprep.subr.mxu0 0.0
    %1932 = vmatpush2.msra.mxu0 0.0
    %1933 = vmatprep.subr.mxu0 0.0
    %1934 = vmatpush2.msra.mxu0 0.0
    %1935 = vmatprep.subr.mxu0 0.0
    %1936 = vmatpush2.msra.mxu0 0.0
    %1937 = vmatprep.subr.mxu0 0.0
    %1938 = vmatpush2.msra.mxu0 0.0
    %1939 = vmatprep.subr.mxu0 0.0
    %1940 = vmatpush2.msra.mxu0 0.0
    %1941 = vmatprep.subr.mxu0 0.0
    %1942 = vmatpush2.msra.mxu0 0.0
    %1943 = vmatprep.subr.mxu0 0.0
    %1944 = vmatpush2.msra.mxu0 0.0
    %1945 = vmatprep.subr.mxu0 0.0
    %1946 = vmatpush2.msra.mxu0 0.0
    %1947 = vmatprep.subr.mxu0 0.0
    %1948 = vmatpush2.msra.mxu0 0.0
    %1949 = vmatprep.subr.mxu0 0.0
    %1950 = vmatpush2.msra.mxu0 0.0
    %1951 = vmatprep.subr.mxu0 0.0
    %1952 = vmatpush2.msra.mxu0 0.0
    %1953 = vmatprep.mubr.f32.mxu0 0.0
    %1954 = vmatmul.mubr.f32.gmra.mxu0 %v1887
    %v1955 = vpop.f32.mrf.mxu0
    %v1956 = vadd.f32 0.0, %v1955
    %v1957 = vpop.f32.mrf.mxu0
    %1958 = vdwg.mxu0
    %v1960 = vsel %vm1027, %v1731, 0
    %1962 = vmatprep.subr.mxu0 0.0
    %1963 = vmatpush1.msra.mxu0 0.0
    %1964 = vmatprep.subr.mxu0 0.0
    %1965 = vmatpush1.msra.mxu0 0.0
    %1966 = vmatprep.subr.mxu0 0.0
    %1967 = vmatpush1.msra.mxu0 0.0
    %1968 = vmatprep.subr.mxu0 0.0
    %1969 = vmatpush1.msra.mxu0 0.0
    %1970 = vmatprep.subr.mxu0 0.0
    %1971 = vmatpush1.msra.mxu0 0.0
    %1972 = vmatprep.subr.mxu0 0.0
    %1973 = vmatpush1.msra.mxu0 0.0
    %1974 = vmatprep.subr.mxu0 0.0
    %1975 = vmatpush1.msra.mxu0 0.0
    %1976 = vmatprep.subr.mxu0 0.0
    %1977 = vmatpush1.msra.mxu0 0.0
    %1978 = vmatprep.subr.mxu0 0.0
    %1979 = vmatpush1.msra.mxu0 0.0
    %1980 = vmatprep.subr.mxu0 0.0
    %1981 = vmatpush1.msra.mxu0 0.0
    %1982 = vmatprep.subr.mxu0 0.0
    %1983 = vmatpush1.msra.mxu0 0.0
    %1984 = vmatprep.subr.mxu0 0.0
    %1985 = vmatpush1.msra.mxu0 0.0
    %1986 = vmatprep.subr.mxu0 0.0
    %1987 = vmatpush1.msra.mxu0 0.0
    %1988 = vmatprep.subr.mxu0 0.0
    %1989 = vmatpush1.msra.mxu0 0.0
    %1990 = vmatprep.subr.mxu0 0.0
    %1991 = vmatpush1.msra.mxu0 0.0
    %1992 = vmatprep.subr.mxu0 0.0
    %1993 = vmatpush1.msra.mxu0 %v868
    %1994 = vmatprep.subr.mxu0 0.0
    %1995 = vmatpush2.msra.mxu0 0.0
    %1996 = vmatprep.subr.mxu0 0.0
    %1997 = vmatpush2.msra.mxu0 0.0
    %1998 = vmatprep.subr.mxu0 0.0
    %1999 = vmatpush2.msra.mxu0 0.0
    %2000 = vmatprep.subr.mxu0 0.0
    %2001 = vmatpush2.msra.mxu0 0.0
    %2002 = vmatprep.subr.mxu0 0.0
    %2003 = vmatpush2.msra.mxu0 0.0
    %2004 = vmatprep.subr.mxu0 0.0
    %2005 = vmatpush2.msra.mxu0 0.0
    %2006 = vmatprep.subr.mxu0 0.0
    %2007 = vmatpush2.msra.mxu0 0.0
    %2008 = vmatprep.subr.mxu0 0.0
    %2009 = vmatpush2.msra.mxu0 0.0
    %2010 = vmatprep.subr.mxu0 0.0
    %2011 = vmatpush2.msra.mxu0 0.0
    %2012 = vmatprep.subr.mxu0 0.0
    %2013 = vmatpush2.msra.mxu0 0.0
    %2014 = vmatprep.subr.mxu0 0.0
    %2015 = vmatpush2.msra.mxu0 0.0
    %2016 = vmatprep.subr.mxu0 0.0
    %2017 = vmatpush2.msra.mxu0 0.0
    %2018 = vmatprep.subr.mxu0 0.0
    %2019 = vmatpush2.msra.mxu0 0.0
    %2020 = vmatprep.subr.mxu0 0.0
    %2021 = vmatpush2.msra.mxu0 0.0
    %2022 = vmatprep.subr.mxu0 0.0
    %2023 = vmatpush2.msra.mxu0 0.0
    %2024 = vmatprep.subr.mxu0 0.0
    %2025 = vmatpush2.msra.mxu0 0.0
    %2026 = vmatprep.mubr.f32.mxu0 0.0
    %2027 = vmatmul.mubr.f32.gmra.mxu0 %v1960
    %v2028 = vpop.f32.mrf.mxu0
    %v2029 = vadd.f32 0.0, %v2028
    %v2030 = vpop.f32.mrf.mxu0
    %2031 = vdwg.mxu0
    %v2033 = vsel %vm1027, %v1733, 0
    %2035 = vmatprep.subr.mxu0 0.0
    %2036 = vmatpush1.msra.mxu0 0.0
    %2037 = vmatprep.subr.mxu0 0.0
    %2038 = vmatpush1.msra.mxu0 0.0
    %2039 = vmatprep.subr.mxu0 0.0
    %2040 = vmatpush1.msra.mxu0 0.0
    %2041 = vmatprep.subr.mxu0 0.0
    %2042 = vmatpush1.msra.mxu0 0.0
    %2043 = vmatprep.subr.mxu0 0.0
    %2044 = vmatpush1.msra.mxu0 0.0
    %2045 = vmatprep.subr.mxu0 0.0
    %2046 = vmatpush1.msra.mxu0 0.0
    %2047 = vmatprep.subr.mxu0 0.0
    %2048 = vmatpush1.msra.mxu0 0.0
    %2049 = vmatprep.subr.mxu0 0.0
    %2050 = vmatpush1.msra.mxu0 0.0
    %2051 = vmatprep.subr.mxu0 0.0
    %2052 = vmatpush1.msra.mxu0 0.0
    %2053 = vmatprep.subr.mxu0 0.0
    %2054 = vmatpush1.msra.mxu0 0.0
    %2055 = vmatprep.subr.mxu0 0.0
    %2056 = vmatpush1.msra.mxu0 0.0
    %2057 = vmatprep.subr.mxu0 0.0
    %2058 = vmatpush1.msra.mxu0 0.0
    %2059 = vmatprep.subr.mxu0 0.0
    %2060 = vmatpush1.msra.mxu0 0.0
    %2061 = vmatprep.subr.mxu0 0.0
    %2062 = vmatpush1.msra.mxu0 0.0
    %2063 = vmatprep.subr.mxu0 0.0
    %2064 = vmatpush1.msra.mxu0 0.0
    %2065 = vmatprep.subr.mxu0 0.0
    %2066 = vmatpush1.msra.mxu0 %v941
    %2067 = vmatprep.subr.mxu0 0.0
    %2068 = vmatpush2.msra.mxu0 0.0
    %2069 = vmatprep.subr.mxu0 0.0
    %2070 = vmatpush2.msra.mxu0 0.0
    %2071 = vmatprep.subr.mxu0 0.0
    %2072 = vmatpush2.msra.mxu0 0.0
    %2073 = vmatprep.subr.mxu0 0.0
    %2074 = vmatpush2.msra.mxu0 0.0
    %2075 = vmatprep.subr.mxu0 0.0
    %2076 = vmatpush2.msra.mxu0 0.0
    %2077 = vmatprep.subr.mxu0 0.0
    %2078 = vmatpush2.msra.mxu0 0.0
    %2079 = vmatprep.subr.mxu0 0.0
    %2080 = vmatpush2.msra.mxu0 0.0
    %2081 = vmatprep.subr.mxu0 0.0
    %2082 = vmatpush2.msra.mxu0 0.0
    %2083 = vmatprep.subr.mxu0 0.0
    %2084 = vmatpush2.msra.mxu0 0.0
    %2085 = vmatprep.subr.mxu0 0.0
    %2086 = vmatpush2.msra.mxu0 0.0
    %2087 = vmatprep.subr.mxu0 0.0
    %2088 = vmatpush2.msra.mxu0 0.0
    %2089 = vmatprep.subr.mxu0 0.0
    %2090 = vmatpush2.msra.mxu0 0.0
    %2091 = vmatprep.subr.mxu0 0.0
    %2092 = vmatpush2.msra.mxu0 0.0
    %2093 = vmatprep.subr.mxu0 0.0
    %2094 = vmatpush2.msra.mxu0 0.0
    %2095 = vmatprep.subr.mxu0 0.0
    %2096 = vmatpush2.msra.mxu0 0.0
    %2097 = vmatprep.subr.mxu0 0.0
    %2098 = vmatpush2.msra.mxu0 0.0
    %2099 = vmatprep.mubr.f32.mxu0 0.0
    %2100 = vmatmul.mubr.f32.gmra.mxu0 %v2033
    %v2101 = vpop.f32.mrf.mxu0
    %v2102 = vadd.f32 0.0, %v2101
    %v2103 = vpop.f32.mrf.mxu0
    %2104 = vdwg.mxu0
    %v2106 = vsel %vm1027, %v1735, 0
    %2108 = vmatprep.subr.mxu0 0.0
    %2109 = vmatpush1.msra.mxu0 0.0
    %2110 = vmatprep.subr.mxu0 0.0
    %2111 = vmatpush1.msra.mxu0 0.0
    %2112 = vmatprep.subr.mxu0 0.0
    %2113 = vmatpush1.msra.mxu0 0.0
    %2114 = vmatprep.subr.mxu0 0.0
    %2115 = vmatpush1.msra.mxu0 0.0
    %2116 = vmatprep.subr.mxu0 0.0
    %2117 = vmatpush1.msra.mxu0 0.0
    %2118 = vmatprep.subr.mxu0 0.0
    %2119 = vmatpush1.msra.mxu0 0.0
    %2120 = vmatprep.subr.mxu0 0.0
    %2121 = vmatpush1.msra.mxu0 0.0
    %2122 = vmatprep.subr.mxu0 0.0
    %2123 = vmatpush1.msra.mxu0 0.0
    %2124 = vmatprep.subr.mxu0 0.0
    %2125 = vmatpush1.msra.mxu0 0.0
    %2126 = vmatprep.subr.mxu0 0.0
    %2127 = vmatpush1.msra.mxu0 0.0
    %2128 = vmatprep.subr.mxu0 0.0
    %2129 = vmatpush1.msra.mxu0 0.0
    %2130 = vmatprep.subr.mxu0 0.0
    %2131 = vmatpush1.msra.mxu0 0.0
    %2132 = vmatprep.subr.mxu0 0.0
    %2133 = vmatpush1.msra.mxu0 0.0
    %2134 = vmatprep.subr.mxu0 0.0
    %2135 = vmatpush1.msra.mxu0 0.0
    %2136 = vmatprep.subr.mxu0 0.0
    %2137 = vmatpush1.msra.mxu0 0.0
    %2138 = vmatprep.subr.mxu0 0.0
    %2139 = vmatpush1.msra.mxu0 %v946
    %2140 = vmatprep.subr.mxu0 0.0
    %2141 = vmatpush2.msra.mxu0 0.0
    %2142 = vmatprep.subr.mxu0 0.0
    %2143 = vmatpush2.msra.mxu0 0.0
    %2144 = vmatprep.subr.mxu0 0.0
    %2145 = vmatpush2.msra.mxu0 0.0
    %2146 = vmatprep.subr.mxu0 0.0
    %2147 = vmatpush2.msra.mxu0 0.0
    %2148 = vmatprep.subr.mxu0 0.0
    %2149 = vmatpush2.msra.mxu0 0.0
    %2150 = vmatprep.subr.mxu0 0.0
    %2151 = vmatpush2.msra.mxu0 0.0
    %2152 = vmatprep.subr.mxu0 0.0
    %2153 = vmatpush2.msra.mxu0 0.0
    %2154 = vmatprep.subr.mxu0 0.0
    %2155 = vmatpush2.msra.mxu0 0.0
    %2156 = vmatprep.subr.mxu0 0.0
    %2157 = vmatpush2.msra.mxu0 0.0
    %2158 = vmatprep.subr.mxu0 0.0
    %2159 = vmatpush2.msra.mxu0 0.0
    %2160 = vmatprep.subr.mxu0 0.0
    %2161 = vmatpush2.msra.mxu0 0.0
    %2162 = vmatprep.subr.mxu0 0.0
    %2163 = vmatpush2.msra.mxu0 0.0
    %2164 = vmatprep.subr.mxu0 0.0
    %2165 = vmatpush2.msra.mxu0 0.0
    %2166 = vmatprep.subr.mxu0 0.0
    %2167 = vmatpush2.msra.mxu0 0.0
    %2168 = vmatprep.subr.mxu0 0.0
    %2169 = vmatpush2.msra.mxu0 0.0
    %2170 = vmatprep.subr.mxu0 0.0
    %2171 = vmatpush2.msra.mxu0 0.0
    %2172 = vmatprep.mubr.f32.mxu0 0.0
    %2173 = vmatmul.mubr.f32.gmra.mxu0 %v2106
    %v2174 = vpop.f32.mrf.mxu0
    %v2175 = vadd.f32 0.0, %v2174
    %v2176 = vpop.f32.mrf.mxu0
    %2177 = vdwg.mxu0
    %v2179 = vsel %vm1027, %v1737, 0
    %2181 = vmatprep.subr.mxu0 0.0
    %2182 = vmatpush1.msra.mxu0 0.0
    %2183 = vmatprep.subr.mxu0 0.0
    %2184 = vmatpush1.msra.mxu0 0.0
    %2185 = vmatprep.subr.mxu0 0.0
    %2186 = vmatpush1.msra.mxu0 0.0
    %2187 = vmatprep.subr.mxu0 0.0
    %2188 = vmatpush1.msra.mxu0 0.0
    %2189 = vmatprep.subr.mxu0 0.0
    %2190 = vmatpush1.msra.mxu0 0.0
    %2191 = vmatprep.subr.mxu0 0.0
    %2192 = vmatpush1.msra.mxu0 0.0
    %2193 = vmatprep.subr.mxu0 0.0
    %2194 = vmatpush1.msra.mxu0 0.0
    %2195 = vmatprep.subr.mxu0 0.0
    %2196 = vmatpush1.msra.mxu0 0.0
    %2197 = vmatprep.subr.mxu0 0.0
    %2198 = vmatpush1.msra.mxu0 0.0
    %2199 = vmatprep.subr.mxu0 0.0
    %2200 = vmatpush1.msra.mxu0 0.0
    %2201 = vmatprep.subr.mxu0 0.0
    %2202 = vmatpush1.msra.mxu0 0.0
    %2203 = vmatprep.subr.mxu0 0.0
    %2204 = vmatpush1.msra.mxu0 0.0
    %2205 = vmatprep.subr.mxu0 0.0
    %2206 = vmatpush1.msra.mxu0 0.0
    %2207 = vmatprep.subr.mxu0 0.0
    %2208 = vmatpush1.msra.mxu0 0.0
    %2209 = vmatprep.subr.mxu0 0.0
    %2210 = vmatpush1.msra.mxu0 0.0
    %2211 = vmatprep.subr.mxu0 0.0
    %2212 = vmatpush1.msra.mxu0 %v1019
    %2213 = vmatprep.subr.mxu0 0.0
    %2214 = vmatpush2.msra.mxu0 0.0
    %2215 = vmatprep.subr.mxu0 0.0
    %2216 = vmatpush2.msra.mxu0 0.0
    %2217 = vmatprep.subr.mxu0 0.0
    %2218 = vmatpush2.msra.mxu0 0.0
    %2219 = vmatprep.subr.mxu0 0.0
    %2220 = vmatpush2.msra.mxu0 0.0
    %2221 = vmatprep.subr.mxu0 0.0
    %2222 = vmatpush2.msra.mxu0 0.0
    %2223 = vmatprep.subr.mxu0 0.0
    %2224 = vmatpush2.msra.mxu0 0.0
    %2225 = vmatprep.subr.mxu0 0.0
    %2226 = vmatpush2.msra.mxu0 0.0
    %2227 = vmatprep.subr.mxu0 0.0
    %2228 = vmatpush2.msra.mxu0 0.0
    %2229 = vmatprep.subr.mxu0 0.0
    %2230 = vmatpush2.msra.mxu0 0.0
    %2231 = vmatprep.subr.mxu0 0.0
    %2232 = vmatpush2.msra.mxu0 0.0
    %2233 = vmatprep.subr.mxu0 0.0
    %2234 = vmatpush2.msra.mxu0 0.0
    %2235 = vmatprep.subr.mxu0 0.0
    %2236 = vmatpush2.msra.mxu0 0.0
    %2237 = vmatprep.subr.mxu0 0.0
    %2238 = vmatpush2.msra.mxu0 0.0
    %2239 = vmatprep.subr.mxu0 0.0
    %2240 = vmatpush2.msra.mxu0 0.0
    %2241 = vmatprep.subr.mxu0 0.0
    %2242 = vmatpush2.msra.mxu0 0.0
    %2243 = vmatprep.subr.mxu0 0.0
    %2244 = vmatpush2.msra.mxu0 0.0
    %2245 = vmatprep.mubr.f32.mxu0 0.0
    %2246 = vmatmul.mubr.f32.gmra.mxu0 %v2179
    %v2247 = vpop.f32.mrf.mxu0
    %v2248 = vadd.f32 0.0, %v2247
    %v2249 = vpop.f32.mrf.mxu0
    %2250 = vdwg.mxu0
    %v2252 = vsel %vm1027, %v1739, 0
    %2254 = vmatprep.subr.mxu0 0.0
    %2255 = vmatpush1.msra.mxu0 0.0
    %2256 = vmatprep.subr.mxu0 0.0
    %2257 = vmatpush1.msra.mxu0 0.0
    %2258 = vmatprep.subr.mxu0 0.0
    %2259 = vmatpush1.msra.mxu0 0.0
    %2260 = vmatprep.subr.mxu0 0.0
    %2261 = vmatpush1.msra.mxu0 0.0
    %2262 = vmatprep.subr.mxu0 0.0
    %2263 = vmatpush1.msra.mxu0 0.0
    %2264 = vmatprep.subr.mxu0 0.0
    %2265 = vmatpush1.msra.mxu0 0.0
    %2266 = vmatprep.subr.mxu0 0.0
    %2267 = vmatpush1.msra.mxu0 0.0
    %2268 = vmatprep.subr.mxu0 0.0
    %2269 = vmatpush1.msra.mxu0 0.0
    %2270 = vmatprep.subr.mxu0 0.0
    %2271 = vmatpush1.msra.mxu0 0.0
    %2272 = vmatprep.subr.mxu0 0.0
    %2273 = vmatpush1.msra.mxu0 0.0
    %2274 = vmatprep.subr.mxu0 0.0
    %2275 = vmatpush1.msra.mxu0 0.0
    %2276 = vmatprep.subr.mxu0 0.0
    %2277 = vmatpush1.msra.mxu0 0.0
    %2278 = vmatprep.subr.mxu0 0.0
    %2279 = vmatpush1.msra.mxu0 0.0
    %2280 = vmatprep.subr.mxu0 0.0
    %2281 = vmatpush1.msra.mxu0 0.0
    %2282 = vmatprep.subr.mxu0 0.0
    %2283 = vmatpush1.msra.mxu0 0.0
    %2284 = vmatprep.subr.mxu0 0.0
    %2285 = vmatpush1.msra.mxu0 %v1024
    %2286 = vmatprep.subr.mxu0 0.0
    %2287 = vmatpush2.msra.mxu0 0.0
    %2288 = vmatprep.subr.mxu0 0.0
    %2289 = vmatpush2.msra.mxu0 0.0
    %2290 = vmatprep.subr.mxu0 0.0
    %2291 = vmatpush2.msra.mxu0 0.0
    %2292 = vmatprep.subr.mxu0 0.0
    %2293 = vmatpush2.msra.mxu0 0.0
    %2294 = vmatprep.subr.mxu0 0.0
    %2295 = vmatpush2.msra.mxu0 0.0
    %2296 = vmatprep.subr.mxu0 0.0
    %2297 = vmatpush2.msra.mxu0 0.0
    %2298 = vmatprep.subr.mxu0 0.0
    %2299 = vmatpush2.msra.mxu0 0.0
    %2300 = vmatprep.subr.mxu0 0.0
    %2301 = vmatpush2.msra.mxu0 0.0
    %2302 = vmatprep.subr.mxu0 0.0
    %2303 = vmatpush2.msra.mxu0 0.0
    %2304 = vmatprep.subr.mxu0 0.0
    %2305 = vmatpush2.msra.mxu0 0.0
    %2306 = vmatprep.subr.mxu0 0.0
    %2307 = vmatpush2.msra.mxu0 0.0
    %2308 = vmatprep.subr.mxu0 0.0
    %2309 = vmatpush2.msra.mxu0 0.0
    %2310 = vmatprep.subr.mxu0 0.0
    %2311 = vmatpush2.msra.mxu0 0.0
    %2312 = vmatprep.subr.mxu0 0.0
    %2313 = vmatpush2.msra.mxu0 0.0
    %2314 = vmatprep.subr.mxu0 0.0
    %2315 = vmatpush2.msra.mxu0 0.0
    %2316 = vmatprep.subr.mxu0 0.0
    %2317 = vmatpush2.msra.mxu0 0.0
    %2318 = vmatprep.mubr.f32.mxu0 0.0
    %2319 = vmatmul.mubr.f32.gmra.mxu0 %v2252
    %v2320 = vpop.f32.mrf.mxu0
    %v2321 = vadd.f32 0.0, %v2320
    %v2322 = vpop.f32.mrf.mxu0
    %2323 = vdwg.mxu0
    %v2324 = vld [vmem:[%s2] sm:$0xff]
    %v2325 = vld [vmem:[%s2 + $0x8] sm:$0xff]
    %v2326 = vld [vmem:[%s2 + $0x10] sm:$0xff]
    %v2327 = vld [vmem:[%s2 + $0x18] sm:$0xff]
    %v2329 = vsel %vm1027, %v1810, 0
    %v2332 = vsel %vm1027, %v1883, 0
    %2334 = vmatprep.subr.mxu0 0.0
    %2335 = vmatpush1.msra.mxu0 0.0
    %2336 = vmatprep.subr.mxu0 0.0
    %2337 = vmatpush1.msra.mxu0 0.0
    %2338 = vmatprep.subr.mxu0 0.0
    %2339 = vmatpush1.msra.mxu0 0.0
    %2340 = vmatprep.subr.mxu0 0.0
    %2341 = vmatpush1.msra.mxu0 0.0
    %2342 = vmatprep.subr.mxu0 0.0
    %2343 = vmatpush1.msra.mxu0 0.0
    %2344 = vmatprep.subr.mxu0 0.0
    %2345 = vmatpush1.msra.mxu0 0.0
    %2346 = vmatprep.subr.mxu0 0.0
    %2347 = vmatpush1.msra.mxu0 0.0
    %2348 = vmatprep.subr.mxu0 0.0
    %2349 = vmatpush1.msra.mxu0 0.0
    %2350 = vmatprep.subr.mxu0 0.0
    %2351 = vmatpush1.msra.mxu0 0.0
    %2352 = vmatprep.subr.mxu0 0.0
    %2353 = vmatpush1.msra.mxu0 0.0
    %2354 = vmatprep.subr.mxu0 0.0
    %2355 = vmatpush1.msra.mxu0 0.0
    %2356 = vmatprep.subr.mxu0 0.0
    %2357 = vmatpush1.msra.mxu0 0.0
    %2358 = vmatprep.subr.mxu0 0.0
    %2359 = vmatpush1.msra.mxu0 0.0
    %2360 = vmatprep.subr.mxu0 0.0
    %2361 = vmatpush1.msra.mxu0 0.0
    %2362 = vmatprep.subr.mxu0 0.0
    %2363 = vmatpush1.msra.mxu0 0.0
    %2364 = vmatprep.subr.mxu0 0.0
    %2365 = vmatpush1.msra.mxu0 %v2324
    %2366 = vmatprep.subr.mxu0 0.0
    %2367 = vmatpush2.msra.mxu0 0.0
    %2368 = vmatprep.subr.mxu0 0.0
    %2369 = vmatpush2.msra.mxu0 0.0
    %2370 = vmatprep.subr.mxu0 0.0
    %2371 = vmatpush2.msra.mxu0 0.0
    %2372 = vmatprep.subr.mxu0 0.0
    %2373 = vmatpush2.msra.mxu0 0.0
    %2374 = vmatprep.subr.mxu0 0.0
    %2375 = vmatpush2.msra.mxu0 0.0
    %2376 = vmatprep.subr.mxu0 0.0
    %2377 = vmatpush2.msra.mxu0 0.0
    %2378 = vmatprep.subr.mxu0 0.0
    %2379 = vmatpush2.msra.mxu0 0.0
    %2380 = vmatprep.subr.mxu0 0.0
    %2381 = vmatpush2.msra.mxu0 0.0
    %2382 = vmatprep.subr.mxu0 0.0
    %2383 = vmatpush2.msra.mxu0 0.0
    %2384 = vmatprep.subr.mxu0 0.0
    %2385 = vmatpush2.msra.mxu0 0.0
    %2386 = vmatprep.subr.mxu0 0.0
    %2387 = vmatpush2.msra.mxu0 0.0
    %2388 = vmatprep.subr.mxu0 0.0
    %2389 = vmatpush2.msra.mxu0 0.0
    %2390 = vmatprep.subr.mxu0 0.0
    %2391 = vmatpush2.msra.mxu0 0.0
    %2392 = vmatprep.subr.mxu0 0.0
    %2393 = vmatpush2.msra.mxu0 0.0
    %2394 = vmatprep.subr.mxu0 0.0
    %2395 = vmatpush2.msra.mxu0 0.0
    %2396 = vmatprep.subr.mxu0 0.0
    %2397 = vmatpush2.msra.mxu0 0.0
    %2398 = vmatprep.mubr.f32.mxu0 0.0
    %2399 = vmatmul.mubr.f32.gmra.mxu0 %v2329
    %v2400 = vpop.f32.mrf.mxu0
    %v2401 = vadd.f32 0.0, %v2400
    %v2402 = vpop.f32.mrf.mxu0
    %2403 = vmatprep.mubr.f32.mxu0 0.0
    %2404 = vmatmul.mubr.f32.gmra.mxu0 %v2332
    %v2405 = vpop.f32.mrf.mxu0
    %v2406 = vadd.f32 0.0, %v2405
    %v2407 = vpop.f32.mrf.mxu0
    %2408 = vdwg.mxu0
    %v2410 = vsel %vm1027, %v1956, 0
    %v2413 = vsel %vm1027, %v2029, 0
    %2415 = vmatprep.subr.mxu0 0.0
    %2416 = vmatpush1.msra.mxu0 0.0
    %2417 = vmatprep.subr.mxu0 0.0
    %2418 = vmatpush1.msra.mxu0 0.0
    %2419 = vmatprep.subr.mxu0 0.0
    %2420 = vmatpush1.msra.mxu0 0.0
    %2421 = vmatprep.subr.mxu0 0.0
    %2422 = vmatpush1.msra.mxu0 0.0
    %2423 = vmatprep.subr.mxu0 0.0
    %2424 = vmatpush1.msra.mxu0 0.0
    %2425 = vmatprep.subr.mxu0 0.0
    %2426 = vmatpush1.msra.mxu0 0.0
    %2427 = vmatprep.subr.mxu0 0.0
    %2428 = vmatpush1.msra.mxu0 0.0
    %2429 = vmatprep.subr.mxu0 0.0
    %2430 = vmatpush1.msra.mxu0 0.0
    %2431 = vmatprep.subr.mxu0 0.0
    %2432 = vmatpush1.msra.mxu0 0.0
    %2433 = vmatprep.subr.mxu0 0.0
    %2434 = vmatpush1.msra.mxu0 0.0
    %2435 = vmatprep.subr.mxu0 0.0
    %2436 = vmatpush1.msra.mxu0 0.0
    %2437 = vmatprep.subr.mxu0 0.0
    %2438 = vmatpush1.msra.mxu0 0.0
    %2439 = vmatprep.subr.mxu0 0.0
    %2440 = vmatpush1.msra.mxu0 0.0
    %2441 = vmatprep.subr.mxu0 0.0
    %2442 = vmatpush1.msra.mxu0 0.0
    %2443 = vmatprep.subr.mxu0 0.0
    %2444 = vmatpush1.msra.mxu0 0.0
    %2445 = vmatprep.subr.mxu0 0.0
    %2446 = vmatpush1.msra.mxu0 %v2325
    %2447 = vmatprep.subr.mxu0 0.0
    %2448 = vmatpush2.msra.mxu0 0.0
    %2449 = vmatprep.subr.mxu0 0.0
    %2450 = vmatpush2.msra.mxu0 0.0
    %2451 = vmatprep.subr.mxu0 0.0
    %2452 = vmatpush2.msra.mxu0 0.0
    %2453 = vmatprep.subr.mxu0 0.0
    %2454 = vmatpush2.msra.mxu0 0.0
    %2455 = vmatprep.subr.mxu0 0.0
    %2456 = vmatpush2.msra.mxu0 0.0
    %2457 = vmatprep.subr.mxu0 0.0
    %2458 = vmatpush2.msra.mxu0 0.0
    %2459 = vmatprep.subr.mxu0 0.0
    %2460 = vmatpush2.msra.mxu0 0.0
    %2461 = vmatprep.subr.mxu0 0.0
    %2462 = vmatpush2.msra.mxu0 0.0
    %2463 = vmatprep.subr.mxu0 0.0
    %2464 = vmatpush2.msra.mxu0 0.0
    %2465 = vmatprep.subr.mxu0 0.0
    %2466 = vmatpush2.msra.mxu0 0.0
    %2467 = vmatprep.subr.mxu0 0.0
    %2468 = vmatpush2.msra.mxu0 0.0
    %2469 = vmatprep.subr.mxu0 0.0
    %2470 = vmatpush2.msra.mxu0 0.0
    %2471 = vmatprep.subr.mxu0 0.0
    %2472 = vmatpush2.msra.mxu0 0.0
    %2473 = vmatprep.subr.mxu0 0.0
    %2474 = vmatpush2.msra.mxu0 0.0
    %2475 = vmatprep.subr.mxu0 0.0
    %2476 = vmatpush2.msra.mxu0 0.0
    %2477 = vmatprep.subr.mxu0 0.0
    %2478 = vmatpush2.msra.mxu0 0.0
    %2479 = vmatprep.mubr.f32.mxu0 0.0
    %2480 = vmatmul.mubr.f32.gmra.mxu0 %v2410
    %v2481 = vpop.f32.mrf.mxu0
    %v2482 = vadd.f32 0.0, %v2481
    %v2483 = vpop.f32.mrf.mxu0
    %2484 = vmatprep.mubr.f32.mxu0 0.0
    %2485 = vmatmul.mubr.f32.gmra.mxu0 %v2413
    %v2486 = vpop.f32.mrf.mxu0
    %v2487 = vadd.f32 0.0, %v2486
    %v2488 = vpop.f32.mrf.mxu0
    %2489 = vdwg.mxu0
    %v2491 = vsel %vm1027, %v2102, 0
    %v2494 = vsel %vm1027, %v2175, 0
    %2496 = vmatprep.subr.mxu0 0.0
    %2497 = vmatpush1.msra.mxu0 0.0
    %2498 = vmatprep.subr.mxu0 0.0
    %2499 = vmatpush1.msra.mxu0 0.0
    %2500 = vmatprep.subr.mxu0 0.0
    %2501 = vmatpush1.msra.mxu0 0.0
    %2502 = vmatprep.subr.mxu0 0.0
    %2503 = vmatpush1.msra.mxu0 0.0
    %2504 = vmatprep.subr.mxu0 0.0
    %2505 = vmatpush1.msra.mxu0 0.0
    %2506 = vmatprep.subr.mxu0 0.0
    %2507 = vmatpush1.msra.mxu0 0.0
    %2508 = vmatprep.subr.mxu0 0.0
    %2509 = vmatpush1.msra.mxu0 0.0
    %2510 = vmatprep.subr.mxu0 0.0
    %2511 = vmatpush1.msra.mxu0 0.0
    %2512 = vmatprep.subr.mxu0 0.0
    %2513 = vmatpush1.msra.mxu0 0.0
    %2514 = vmatprep.subr.mxu0 0.0
    %2515 = vmatpush1.msra.mxu0 0.0
    %2516 = vmatprep.subr.mxu0 0.0
    %2517 = vmatpush1.msra.mxu0 0.0
    %2518 = vmatprep.subr.mxu0 0.0
    %2519 = vmatpush1.msra.mxu0 0.0
    %2520 = vmatprep.subr.mxu0 0.0
    %2521 = vmatpush1.msra.mxu0 0.0
    %2522 = vmatprep.subr.mxu0 0.0
    %2523 = vmatpush1.msra.mxu0 0.0
    %2524 = vmatprep.subr.mxu0 0.0
    %2525 = vmatpush1.msra.mxu0 0.0
    %2526 = vmatprep.subr.mxu0 0.0
    %2527 = vmatpush1.msra.mxu0 %v2326
    %2528 = vmatprep.subr.mxu0 0.0
    %2529 = vmatpush2.msra.mxu0 0.0
    %2530 = vmatprep.subr.mxu0 0.0
    %2531 = vmatpush2.msra.mxu0 0.0
    %2532 = vmatprep.subr.mxu0 0.0
    %2533 = vmatpush2.msra.mxu0 0.0
    %2534 = vmatprep.subr.mxu0 0.0
    %2535 = vmatpush2.msra.mxu0 0.0
    %2536 = vmatprep.subr.mxu0 0.0
    %2537 = vmatpush2.msra.mxu0 0.0
    %2538 = vmatprep.subr.mxu0 0.0
    %2539 = vmatpush2.msra.mxu0 0.0
    %2540 = vmatprep.subr.mxu0 0.0
    %2541 = vmatpush2.msra.mxu0 0.0
    %2542 = vmatprep.subr.mxu0 0.0
    %2543 = vmatpush2.msra.mxu0 0.0
    %2544 = vmatprep.subr.mxu0 0.0
    %2545 = vmatpush2.msra.mxu0 0.0
    %2546 = vmatprep.subr.mxu0 0.0
    %2547 = vmatpush2.msra.mxu0 0.0
    %2548 = vmatprep.subr.mxu0 0.0
    %2549 = vmatpush2.msra.mxu0 0.0
    %2550 = vmatprep.subr.mxu0 0.0
    %2551 = vmatpush2.msra.mxu0 0.0
    %2552 = vmatprep.subr.mxu0 0.0
    %2553 = vmatpush2.msra.mxu0 0.0
    %2554 = vmatprep.subr.mxu0 0.0
    %2555 = vmatpush2.msra.mxu0 0.0
    %2556 = vmatprep.subr.mxu0 0.0
    %2557 = vmatpush2.msra.mxu0 0.0
    %2558 = vmatprep.subr.mxu0 0.0
    %2559 = vmatpush2.msra.mxu0 0.0
    %2560 = vmatprep.mubr.f32.mxu0 0.0
    %2561 = vmatmul.mubr.f32.gmra.mxu0 %v2491
    %v2562 = vpop.f32.mrf.mxu0
    %v2563 = vadd.f32 0.0, %v2562
    %v2564 = vpop.f32.mrf.mxu0
    %2565 = vmatprep.mubr.f32.mxu0 0.0
    %2566 = vmatmul.mubr.f32.gmra.mxu0 %v2494
    %v2567 = vpop.f32.mrf.mxu0
    %v2568 = vadd.f32 0.0, %v2567
    %v2569 = vpop.f32.mrf.mxu0
    %2570 = vdwg.mxu0
    %v2572 = vsel %vm1027, %v2248, 0
    %v2575 = vsel %vm1027, %v2321, 0
    %2577 = vmatprep.subr.mxu0 0.0
    %2578 = vmatpush1.msra.mxu0 0.0
    %2579 = vmatprep.subr.mxu0 0.0
    %2580 = vmatpush1.msra.mxu0 0.0
    %2581 = vmatprep.subr.mxu0 0.0
    %2582 = vmatpush1.msra.mxu0 0.0
    %2583 = vmatprep.subr.mxu0 0.0
    %2584 = vmatpush1.msra.mxu0 0.0
    %2585 = vmatprep.subr.mxu0 0.0
    %2586 = vmatpush1.msra.mxu0 0.0
    %2587 = vmatprep.subr.mxu0 0.0
    %2588 = vmatpush1.msra.mxu0 0.0
    %2589 = vmatprep.subr.mxu0 0.0
    %2590 = vmatpush1.msra.mxu0 0.0
    %2591 = vmatprep.subr.mxu0 0.0
    %2592 = vmatpush1.msra.mxu0 0.0
    %2593 = vmatprep.subr.mxu0 0.0
    %2594 = vmatpush1.msra.mxu0 0.0
    %2595 = vmatprep.subr.mxu0 0.0
    %2596 = vmatpush1.msra.mxu0 0.0
    %2597 = vmatprep.subr.mxu0 0.0
    %2598 = vmatpush1.msra.mxu0 0.0
    %2599 = vmatprep.subr.mxu0 0.0
    %2600 = vmatpush1.msra.mxu0 0.0
    %2601 = vmatprep.subr.mxu0 0.0
    %2602 = vmatpush1.msra.mxu0 0.0
    %2603 = vmatprep.subr.mxu0 0.0
    %2604 = vmatpush1.msra.mxu0 0.0
    %2605 = vmatprep.subr.mxu0 0.0
    %2606 = vmatpush1.msra.mxu0 0.0
    %2607 = vmatprep.subr.mxu0 0.0
    %2608 = vmatpush1.msra.mxu0 %v2327
    %2609 = vmatprep.subr.mxu0 0.0
    %2610 = vmatpush2.msra.mxu0 0.0
    %2611 = vmatprep.subr.mxu0 0.0
    %2612 = vmatpush2.msra.mxu0 0.0
    %2613 = vmatprep.subr.mxu0 0.0
    %2614 = vmatpush2.msra.mxu0 0.0
    %2615 = vmatprep.subr.mxu0 0.0
    %2616 = vmatpush2.msra.mxu0 0.0
    %2617 = vmatprep.subr.mxu0 0.0
    %2618 = vmatpush2.msra.mxu0 0.0
    %2619 = vmatprep.subr.mxu0 0.0
    %2620 = vmatpush2.msra.mxu0 0.0
    %2621 = vmatprep.subr.mxu0 0.0
    %2622 = vmatpush2.msra.mxu0 0.0
    %2623 = vmatprep.subr.mxu0 0.0
    %2624 = vmatpush2.msra.mxu0 0.0
    %2625 = vmatprep.subr.mxu0 0.0
    %2626 = vmatpush2.msra.mxu0 0.0
    %2627 = vmatprep.subr.mxu0 0.0
    %2628 = vmatpush2.msra.mxu0 0.0
    %2629 = vmatprep.subr.mxu0 0.0
    %2630 = vmatpush2.msra.mxu0 0.0
    %2631 = vmatprep.subr.mxu0 0.0
    %2632 = vmatpush2.msra.mxu0 0.0
    %2633 = vmatprep.subr.mxu0 0.0
    %2634 = vmatpush2.msra.mxu0 0.0
    %2635 = vmatprep.subr.mxu0 0.0
    %2636 = vmatpush2.msra.mxu0 0.0
    %2637 = vmatprep.subr.mxu0 0.0
    %2638 = vmatpush2.msra.mxu0 0.0
    %2639 = vmatprep.subr.mxu0 0.0
    %2640 = vmatpush2.msra.mxu0 0.0
    %2641 = vmatprep.mubr.f32.mxu0 0.0
    %2642 = vmatmul.mubr.f32.gmra.mxu0 %v2572
    %v2643 = vpop.f32.mrf.mxu0
    %v2644 = vadd.f32 0.0, %v2643
    %v2645 = vpop.f32.mrf.mxu0
    %2646 = vmatprep.mubr.f32.mxu0 0.0
    %2647 = vmatmul.mubr.f32.gmra.mxu0 %v2575
    %v2648 = vpop.f32.mrf.mxu0
    %v2649 = vadd.f32 0.0, %v2648
    %v2650 = vpop.f32.mrf.mxu0
    %2651 = vdwg.mxu0
    %vm2652 = vcmask 261120
    %v2653 = vsel %vm2652, %v2401, 0.0
    %v2654 = vsel %vm2652, %v2482, 0.0
    %v2655 = vadd.f32 %v2653, %v2654
    %v2656 = vsel %vm2652, %v2563, 0.0
    %v2657 = vadd.f32 %v2655, %v2656
    %v2658 = vsel %vm2652, %v2644, 0.0
    %v2659 = vadd.f32 %v2657, %v2658
    %v2660 = vsel %vm2652, %v2406, 0.0
    %v2661 = vsel %vm2652, %v2487, 0.0
    %v2662 = vadd.f32 %v2660, %v2661
    %v2663 = vsel %vm2652, %v2568, 0.0
    %v2664 = vadd.f32 %v2662, %v2663
    %v2665 = vsel %vm2652, %v2649, 0.0
    %v2666 = vadd.f32 %v2664, %v2665
    %v2667 = vld [vmem:[%s3] sm:$0x1]
    %v2669 = vlaneseq
    %v2670 = vshrl.u32 %v2669, 7
    %v2671 = vsub.s32 0, %v2670
    %v2672 = vrot.slane %v2667, %v2671
    %v2674 = vadd.f32 %v2659, %v2672
    %v2675 = vadd.f32 %v2666, %v2672
    %2676 = vst.msk [vmem:[#allocation2] sm:$0xff] %vm2652, %v2674
    %2677 = vst.msk [vmem:[#allocation2 + $0x8] sm:$0xff] %vm2652, %v2675
    // Predicated region
    $region22: #{multi_decay_temporal_attention.1} parent=1 // pred_check
      _
    $region23: #{multi_decay_temporal_attention.1} parent=1 // pred_check_branch
      %2679 = sbr.rel (0) target = $region25
    $region24: #{multi_decay_temporal_attention.1} parent=1 // pred_region
      %s2681 = ssub.s32 256, 256
      %2682 = vsyncadd [#allocation3], %s2681
      %s2683 = sshll.u32 [#allocation2], 4
      %s2684 = int_to_ptr.vmem [resolvable:$true] %s2683
      %2689 = dma.vmem_to_hbm [thread:$0]  %s2684, 256, %s5, [#allocation3], 128, 128, 8
    $region25: #{multi_decay_temporal_attention.1} parent=1 // pred_fallthru
      _
    // Predicated region
    $region26: #{multi_decay_temporal_attention.1} parent=1 // pred_check
      _
    $region27: #{multi_decay_temporal_attention.1} parent=1 // pred_check_branch
      %2691 = sbr.rel (0) target = $region29
    $region28: #{multi_decay_temporal_attention.1} parent=1 // pred_region
      %2692 = dma.done [#allocation3], 256
    $region29: #{multi_decay_temporal_attention.1} parent=1 // pred_fallthru
      _
    %2693 = vsyncpa [#allocation3], 1

</llo_original>
